<compile_context>
chip_gen: v7x
topology: tpu7x:2x2x1
jax: 0.10.0
libtpu: 0.0.40
codegen_flags: <defaults>
</compile_context>

<pallas_src>
import jax
import jax.numpy as jnp
from jax import lax
from jax.experimental import pallas as pl
from jax.experimental.pallas import tpu as pltpu


def _fused_conv_maxpool_kernel(x_ref, w_ref, b_ref, vlen_ref, act_ref, loc_ref):
    """Fused valid Conv1d (all kernel sizes at once) + global max / argmax.

    x_ref:    (TB, S_pad, E)      bf16  channels-last embeddings, S_pad = S + ks_max - 1
                                        (zero padded at the end of the sequence)
    w_ref:    (ks_max, E, KFpad)  bf16  taps zero-padded per kernel size; filters of all
                                        kernel sizes concatenated on the lane axis
    b_ref:    (1, KFpad)          f32   concatenated biases (0 on pad lanes)
    vlen_ref: (1, KFpad)          i32   per-lane valid conv length S - ks_k + 1 (0 on pad lanes)
    act_ref:  (TB, KFpad)         f32   max-pooled activations
    loc_ref:  (TB, KFpad)         i32   argmax position along the conv output axis
    """
    TB, S_pad, E = x_ref.shape
    ks_max, _, KFp = w_ref.shape
    S = S_pad - ks_max + 1                     # original sequence length (static)

    x = x_ref[...]                             # (TB, S_pad, E) bf16

    # Accumulator initialised with the (broadcast) bias: bias folded into init.
    acc = jnp.zeros((TB, S, KFp), jnp.float32) + b_ref[...]

    # One wide MXU matmul per tap over the full (padded) sequence; combine taps by
    # slicing the *narrow* KFpad-lane result instead of re-slicing the big MXU operand.
    for j in range(ks_max):                    # static unroll over the (few) taps
        yj = lax.dot_general(
            x, w_ref[j],
            dimension_numbers=(((2,), (0,)), ((), ())),
            preferred_element_type=jnp.float32)        # (TB, S_pad, KFp)
        acc = acc + yj[:, j:j + S, :]

    # Positions t >= S - ks_k + 1 use zero-padded x rows -> mask them per lane.
    pos = lax.broadcasted_iota(jnp.int32, (TB, S, KFp), 1)
    acc = jnp.where(pos < vlen_ref[...], acc, jnp.float32(-jnp.inf))

    # Global max-pool with indices (MaxPool1d(kernel=L_k, return_indices=True)).
    m = jnp.max(acc, axis=1)                               # (TB, KFp)
    cand = jnp.where(acc == m[:, None, :], pos, jnp.int32(S))
    loc = jnp.min(cand, axis=1)                            # first index attaining the max

    act_ref[...] = m
    loc_ref[...] = loc.astype(jnp.int32)


def cnn_logit_extracts(x_ids, embed_table, conv_weights, conv_biases, *, batch_tile=8):
    """Full CnnLogitExtracts.forward.

    x_ids:        (B, S) int32 token ids
    embed_table:  (n_terms, E)
    conv_weights: list of (F, E, ks) arrays (torch Conv1d layout)
    conv_biases:  list of (F,) arrays
    Returns (locs, activs), each (B, K, F); locs int32, activs float32.
    """
    if x_ids.ndim == 1:
        x_ids = x_ids[None, :]
    B, S = x_ids.shape
    E = embed_table.shape[1]
    F = conv_weights[0].shape[0]
    K = len(conv_weights)
    ks_list = [int(w.shape[2]) for w in conv_weights]
    ks_max = max(ks_list)
    KF = K * F
    # Lane-dense output / MXU N width. 128 minimum; targeting 256 is better on v6e/v7x
    # once K*F is large enough to fill it.
    KFp = max(128, pl.cdiv(KF, 128) * 128)

    # bf16 embedding gather: halves HBM traffic of the dominant (B, S, E) tensor.
    # TODO(synk): gather embedding rows inside the kernel (PrefetchScalarGridSpec +
    # manual DMA from the HBM table) to avoid materializing x_emb in HBM at all.
    x_emb = embed_table.astype(jnp.bfloat16)[x_ids]                  # (B, S, E)

    # Fused weights (ks_max, E, KFpad): taps zero-padded per kernel size, filters of all
    # kernel sizes concatenated along the lane axis (torch layout is (F, E, ks)).
    w_parts = []
    for w, ks in zip(conv_weights, ks_list):
        wk = jnp.transpose(w, (2, 1, 0)).astype(jnp.float32)         # (ks, E, F)
        w_parts.append(jnp.pad(wk, ((0, ks_max - ks), (0, 0), (0, 0))))
    w_cat = jnp.concatenate(w_parts, axis=-1)                        # (ks_max, E, K*F)
    w_cat = jnp.pad(w_cat, ((0, 0), (0, 0), (0, KFp - KF))).astype(jnp.bfloat16)

    b_cat = jnp.concatenate([b.astype(jnp.float32) for b in conv_biases])
    b_cat = jnp.pad(b_cat, (0, KFp - KF)).reshape(1, KFp)

    vlen = jnp.concatenate([jnp.full((F,), S - ks + 1, jnp.int32) for ks in ks_list])
    vlen = jnp.pad(vlen, (0, KFp - KF)).reshape(1, KFp)

    # Batch tiling: grid over batch tiles, marked "parallel" (v7x has 2 TensorCores/chip).
    # TODO(synk): for very long sequences add an S-tile grid axis with a running
    # (max, argmax) accumulator in VMEM scratch so the (TB, S, KFpad) block stays bounded.
    TB = batch_tile
    Bp = pl.cdiv(B, TB) * TB
    S_pad = S + ks_max - 1
    x_emb = jnp.pad(x_emb, ((0, Bp - B), (0, ks_max - 1), (0, 0)))   # (Bp, S_pad, E)

    act, loc = pl.pallas_call(
        _fused_conv_maxpool_kernel,
        out_shape=(jax.ShapeDtypeStruct((Bp, KFp), jnp.float32),
                   jax.ShapeDtypeStruct((Bp, KFp), jnp.int32)),
        grid=(Bp // TB,),
        in_specs=[
            pl.BlockSpec((TB, S_pad, E), lambda i: (i, 0, 0)),
            pl.BlockSpec((ks_max, E, KFp), lambda i: (0, 0, 0)),
            pl.BlockSpec((1, KFp), lambda i: (0, 0)),
            pl.BlockSpec((1, KFp), lambda i: (0, 0)),
        ],
        out_specs=(
            pl.BlockSpec((TB, KFp), lambda i: (i, 0)),
            pl.BlockSpec((TB, KFp), lambda i: (i, 0)),
        ),
        compiler_params=pltpu.CompilerParams(
            dimension_semantics=("parallel",),
            # Tiles are sized well under the smallest (v7x, 64 MiB physical) VMEM;
            # 32 MiB scoped is safe on v5e/v6e/v7x with double-buffered inputs.
            vmem_limit_bytes=32 * 1024 * 1024),
    )(x_emb, w_cat, b_cat, vlen)

    locs = loc[:B, :KF].reshape(B, K, F)          # == torch cat(1) of pool indices
    activs = act[:B, :KF].reshape(B, K, F)        # == torch cat(0) of pool values
    return locs, activs


def _reference(x_ids, embed_table, conv_weights, conv_biases):
    """Pure-JAX reference fed the same bf16-rounded inputs the kernel sees."""
    emb = embed_table.astype(jnp.bfloat16).astype(jnp.float32)
    x_emb = emb[x_ids]                            # (B, S, E)
    locs, activs = [], []
    for w, b in zip(conv_weights, conv_biases):
        F, E, ks = w.shape
        wf = w.astype(jnp.bfloat16).astype(jnp.float32)
        L = x_emb.shape[1] - ks + 1
        out = jnp.zeros((x_emb.shape[0], L, F), jnp.float32)
        for j in range(ks):
            out = out + jnp.einsum('ble,fe->blf', x_emb[:, j:j + L, :], wf[:, :, j])
        out = out + b[None, None, :].astype(jnp.float32)
        activs.append(jnp.max(out, axis=1))
        locs.append(jnp.argmax(out, axis=1).astype(jnp.int32))
    return jnp.stack(locs, axis=1), jnp.stack(activs, axis=1)


if __name__ == "__main__":
    B, S, E, F = 16, 16, 32, 8
    n_terms = 50
    kernel_sizes = (3, 4, 5)

    key = jax.random.PRNGKey(0)
    k_emb, k_w, k_b, k_x = jax.random.split(key, 4)
    embed_table = 0.1 * jax.random.normal(k_emb, (n_terms, E), jnp.float32)
    w_keys = jax.random.split(k_w, len(kernel_sizes))
    b_keys = jax.random.split(k_b, len(kernel_sizes))
    conv_weights = [0.1 * jax.random.normal(wk, (F, E, ks), jnp.float32)
                    for wk, ks in zip(w_keys, kernel_sizes)]
    conv_biases = [0.1 * jax.random.normal(bk, (F,), jnp.float32) for bk in b_keys]
    x_ids = jax.random.randint(k_x, (B, S), 0, n_terms, jnp.int32)

    locs, activs = cnn_logit_extracts(x_ids, embed_table, conv_weights, conv_biases)
    jax.block_until_ready((locs, activs))

    ref_locs, ref_activs = _reference(x_ids, embed_table, conv_weights, conv_biases)
    K = len(kernel_sizes)
    assert locs.shape == (B, K, F) and activs.shape == (B, K, F)
    assert jnp.array_equal(locs, ref_locs), "argmax locations mismatch"
    assert jnp.allclose(activs, ref_activs, atol=1e-4, rtol=1e-4), "activations mismatch"

    print("KERNEL_OK")
</pallas_src>

<mosaic_0001>
module attributes {stable_mosaic.version = 11 : i64} {
  func.func @_fused_conv_maxpool_kernel(%arg0: i32, %arg1: memref<8x20x32xbf16, #tpu.memory_space<vmem>>, %arg2: memref<5x32x128xbf16, #tpu.memory_space<vmem>>, %arg3: memref<1x128xf32, #tpu.memory_space<vmem>>, %arg4: memref<1x128xi32, #tpu.memory_space<vmem>>, %arg5: memref<8x128xf32, #tpu.memory_space<vmem>>, %arg6: memref<8x128xi32, #tpu.memory_space<vmem>>) attributes {dimension_semantics = [#tpu.dimension_semantics<parallel>], iteration_bounds = array<i64: 2>, scalar_prefetch = 0 : i64, scratch_operands = 0 : i64, tpu.core_type = #tpu.core_type<tc>, window_params = [{transform_indices = @transform_0, window_bounds = array<i64: 8, 20, 32>}, {pipeline_mode = #tpu.pipeline_mode<synchronous>, transform_indices = @transform_1, window_bounds = array<i64: 5, 32, 128>}, {pipeline_mode = #tpu.pipeline_mode<synchronous>, transform_indices = @transform_2, window_bounds = array<i64: 1, 128>}, {pipeline_mode = #tpu.pipeline_mode<synchronous>, transform_indices = @transform_3, window_bounds = array<i64: 1, 128>}, {transform_indices = @transform_4, window_bounds = array<i64: 8, 128>}, {transform_indices = @transform_5, window_bounds = array<i64: 8, 128>}]} {
    %c0 = arith.constant 0 : index
    %c0_0 = arith.constant 0 : index
    %c0_1 = arith.constant 0 : index
    %0 = vector.load %arg1[%c0, %c0_0, %c0_1] : memref<8x20x32xbf16, #tpu.memory_space<vmem>>, vector<8x20x32xbf16>
    %cst = arith.constant 0.000000e+00 : f32
    %1 = vector.broadcast %cst : f32 to vector<8x16x128xf32>
    %c0_2 = arith.constant 0 : index
    %c0_3 = arith.constant 0 : index
    %2 = vector.load %arg3[%c0_2, %c0_3] : memref<1x128xf32, #tpu.memory_space<vmem>>, vector<1x128xf32>
    %3 = vector.shape_cast %2 : vector<1x128xf32> to vector<1x1x128xf32>
    %4 = vector.broadcast %3 : vector<1x1x128xf32> to vector<8x16x128xf32>
    %5 = arith.addf %1, %4 : vector<8x16x128xf32>
    %c0_4 = arith.constant 0 : index
    %c0_5 = arith.constant 0 : index
    %c0_6 = arith.constant 0 : index
    %6 = vector.load %arg2[%c0_4, %c0_5, %c0_6] : memref<5x32x128xbf16, #tpu.memory_space<vmem>>, vector<1x32x128xbf16>
    %7 = vector.shape_cast %6 : vector<1x32x128xbf16> to vector<32x128xbf16>
    %cst_7 = arith.constant dense<0.000000e+00> : vector<8x20x128xf32>
    %8 = tpu.matmul %0, %7, %cst_7 {dimension_numbers = #tpu.dot_dimension_numbers<[2], [0], [0, 1], [1], [0, 0, 0, 1, 1, 1], [], []>} : vector<8x20x32xbf16>, vector<32x128xbf16>, vector<8x20x128xf32> -> vector<8x20x128xf32>
    %9 = vector.extract_strided_slice %8 {offsets = [0, 0, 0], sizes = [8, 16, 128], strides = [1, 1, 1]} : vector<8x20x128xf32> to vector<8x16x128xf32>
    %10 = arith.addf %5, %9 : vector<8x16x128xf32>
    %c1 = arith.constant 1 : index
    %c0_8 = arith.constant 0 : index
    %c0_9 = arith.constant 0 : index
    %11 = vector.load %arg2[%c1, %c0_8, %c0_9] : memref<5x32x128xbf16, #tpu.memory_space<vmem>>, vector<1x32x128xbf16>
    %12 = vector.shape_cast %11 : vector<1x32x128xbf16> to vector<32x128xbf16>
    %cst_10 = arith.constant dense<0.000000e+00> : vector<8x20x128xf32>
    %13 = tpu.matmul %0, %12, %cst_10 {dimension_numbers = #tpu.dot_dimension_numbers<[2], [0], [0, 1], [1], [0, 0, 0, 1, 1, 1], [], []>} : vector<8x20x32xbf16>, vector<32x128xbf16>, vector<8x20x128xf32> -> vector<8x20x128xf32>
    %14 = vector.extract_strided_slice %13 {offsets = [0, 1, 0], sizes = [8, 16, 128], strides = [1, 1, 1]} : vector<8x20x128xf32> to vector<8x16x128xf32>
    %15 = arith.addf %10, %14 : vector<8x16x128xf32>
    %c2 = arith.constant 2 : index
    %c0_11 = arith.constant 0 : index
    %c0_12 = arith.constant 0 : index
    %16 = vector.load %arg2[%c2, %c0_11, %c0_12] : memref<5x32x128xbf16, #tpu.memory_space<vmem>>, vector<1x32x128xbf16>
    %17 = vector.shape_cast %16 : vector<1x32x128xbf16> to vector<32x128xbf16>
    %cst_13 = arith.constant dense<0.000000e+00> : vector<8x20x128xf32>
    %18 = tpu.matmul %0, %17, %cst_13 {dimension_numbers = #tpu.dot_dimension_numbers<[2], [0], [0, 1], [1], [0, 0, 0, 1, 1, 1], [], []>} : vector<8x20x32xbf16>, vector<32x128xbf16>, vector<8x20x128xf32> -> vector<8x20x128xf32>
    %19 = vector.extract_strided_slice %18 {offsets = [0, 2, 0], sizes = [8, 16, 128], strides = [1, 1, 1]} : vector<8x20x128xf32> to vector<8x16x128xf32>
    %20 = arith.addf %15, %19 : vector<8x16x128xf32>
    %c3 = arith.constant 3 : index
    %c0_14 = arith.constant 0 : index
    %c0_15 = arith.constant 0 : index
    %21 = vector.load %arg2[%c3, %c0_14, %c0_15] : memref<5x32x128xbf16, #tpu.memory_space<vmem>>, vector<1x32x128xbf16>
    %22 = vector.shape_cast %21 : vector<1x32x128xbf16> to vector<32x128xbf16>
    %cst_16 = arith.constant dense<0.000000e+00> : vector<8x20x128xf32>
    %23 = tpu.matmul %0, %22, %cst_16 {dimension_numbers = #tpu.dot_dimension_numbers<[2], [0], [0, 1], [1], [0, 0, 0, 1, 1, 1], [], []>} : vector<8x20x32xbf16>, vector<32x128xbf16>, vector<8x20x128xf32> -> vector<8x20x128xf32>
    %24 = vector.extract_strided_slice %23 {offsets = [0, 3, 0], sizes = [8, 16, 128], strides = [1, 1, 1]} : vector<8x20x128xf32> to vector<8x16x128xf32>
    %25 = arith.addf %20, %24 : vector<8x16x128xf32>
    %c4 = arith.constant 4 : index
    %c0_17 = arith.constant 0 : index
    %c0_18 = arith.constant 0 : index
    %26 = vector.load %arg2[%c4, %c0_17, %c0_18] : memref<5x32x128xbf16, #tpu.memory_space<vmem>>, vector<1x32x128xbf16>
    %27 = vector.shape_cast %26 : vector<1x32x128xbf16> to vector<32x128xbf16>
    %cst_19 = arith.constant dense<0.000000e+00> : vector<8x20x128xf32>
    %28 = tpu.matmul %0, %27, %cst_19 {dimension_numbers = #tpu.dot_dimension_numbers<[2], [0], [0, 1], [1], [0, 0, 0, 1, 1, 1], [], []>} : vector<8x20x32xbf16>, vector<32x128xbf16>, vector<8x20x128xf32> -> vector<8x20x128xf32>
    %29 = vector.extract_strided_slice %28 {offsets = [0, 4, 0], sizes = [8, 16, 128], strides = [1, 1, 1]} : vector<8x20x128xf32> to vector<8x16x128xf32>
    %30 = arith.addf %25, %29 : vector<8x16x128xf32>
    %31 = tpu.iota {dimensions = array<i32: 1>} : vector<8x16x128xi32>
    %c0_20 = arith.constant 0 : index
    %c0_21 = arith.constant 0 : index
    %32 = vector.load %arg4[%c0_20, %c0_21] : memref<1x128xi32, #tpu.memory_space<vmem>>, vector<1x128xi32>
    %33 = vector.shape_cast %32 : vector<1x128xi32> to vector<1x1x128xi32>
    %34 = vector.broadcast %33 : vector<1x1x128xi32> to vector<8x16x128xi32>
    %35 = arith.cmpi slt, %31, %34 : vector<8x16x128xi32>
    %cst_22 = arith.constant 0xFF800000 : f32
    %36 = vector.broadcast %cst_22 : f32 to vector<8x16x128xf32>
    %37 = arith.select %35, %30, %36 : vector<8x16x128xi1>, vector<8x16x128xf32>
    %cst_23 = arith.constant dense<0xFF800000> : vector<8x128xf32>
    %38 = vector.multi_reduction <maximumf>, %37, %cst_23 [1] : vector<8x16x128xf32> to vector<8x128xf32>
    %39 = vector.shape_cast %38 : vector<8x128xf32> to vector<8x1x128xf32>
    %40 = vector.broadcast %39 : vector<8x1x128xf32> to vector<8x16x128xf32>
    %41 = arith.cmpf oeq, %37, %40 : vector<8x16x128xf32>
    %c16_i32 = arith.constant 16 : i32
    %42 = vector.broadcast %c16_i32 : i32 to vector<8x16x128xi32>
    %43 = arith.select %41, %31, %42 : vector<8x16x128xi1>, vector<8x16x128xi32>
    %cst_24 = arith.constant dense<2147483647> : vector<8x128xi32>
    %44 = vector.multi_reduction <minsi>, %43, %cst_24 [1] : vector<8x16x128xi32> to vector<8x128xi32>
    %c0_25 = arith.constant 0 : index
    %c0_26 = arith.constant 0 : index
    %45 = vector.load %arg5[%c0_25, %c0_26] : memref<8x128xf32, #tpu.memory_space<vmem>>, vector<8x128xf32>
    tpu.vector_store %arg5[%c0_25, %c0_26], %38 {strides = array<i32>} : memref<8x128xf32, #tpu.memory_space<vmem>>, vector<8x128xf32>,
    %c0_27 = arith.constant 0 : index
    %c0_28 = arith.constant 0 : index
    %46 = vector.load %arg6[%c0_27, %c0_28] : memref<8x128xi32, #tpu.memory_space<vmem>>, vector<8x128xi32>
    tpu.vector_store %arg6[%c0_27, %c0_28], %44 {strides = array<i32>} : memref<8x128xi32, #tpu.memory_space<vmem>>, vector<8x128xi32>,
    return
  }
  func.func @transform_0(%arg0: i32) -> (i32, i32, i32) {
    %c0_i32 = arith.constant 0 : i32
    %c0_i32_0 = arith.constant 0 : i32
    %c0_i32_1 = arith.constant 0 : i32
    return %arg0, %c0_i32, %c0_i32_0 : i32, i32, i32
  }
  func.func @transform_1(%arg0: i32) -> (i32, i32, i32) {
    %c0_i32 = arith.constant 0 : i32
    %c0_i32_0 = arith.constant 0 : i32
    %c0_i32_1 = arith.constant 0 : i32
    %c0_i32_2 = arith.constant 0 : i32
    return %c0_i32, %c0_i32_0, %c0_i32_1 : i32, i32, i32
  }
  func.func @transform_2(%arg0: i32) -> (i32, i32) {
    %c0_i32 = arith.constant 0 : i32
    %c0_i32_0 = arith.constant 0 : i32
    %c0_i32_1 = arith.constant 0 : i32
    return %c0_i32, %c0_i32_0 : i32, i32
  }
  func.func @transform_3(%arg0: i32) -> (i32, i32) {
    %c0_i32 = arith.constant 0 : i32
    %c0_i32_0 = arith.constant 0 : i32
    %c0_i32_1 = arith.constant 0 : i32
    return %c0_i32, %c0_i32_0 : i32, i32
  }
  func.func @transform_4(%arg0: i32) -> (i32, i32) {
    %c0_i32 = arith.constant 0 : i32
    %c0_i32_0 = arith.constant 0 : i32
    return %arg0, %c0_i32 : i32, i32
  }
  func.func @transform_5(%arg0: i32) -> (i32, i32) {
    %c0_i32 = arith.constant 0 : i32
    %c0_i32_0 = arith.constant 0 : i32
    return %arg0, %c0_i32 : i32, i32
  }
}

</mosaic_0001>

<llo_original>
// kernel: tpu_custom_call.1
$region0: #{tpu_custom_call.1}
  #allocation0 [shape = 'u32[]', space=smem, size = 0x4, offset = 0x4, fixed_abs, tag = 'smem constant byte address 0x4 - core index']
  #allocation1 [shape = 'u32[144,128]{1,0:T(1,128)}', space=vmem, size = 0x12000, scoped, tag = 'internal scratch']
  %s0 = inlined_call_operand.vmem [shape: bf16[16,20,32], index: 0, kind: input, shape index: {}]
  %s1 = inlined_call_operand.vmem [shape: bf16[5,32,128], index: 1, kind: input, shape index: {}]
  %s2 = inlined_call_operand.vmem [shape: f32[1,128], index: 2, kind: input, shape index: {}]
  %s3 = inlined_call_operand.vmem [shape: s32[1,128], index: 3, kind: input, shape index: {}]
  %s4 = inlined_call_operand.hbm [shape: f32[16,128], index: 4, kind: output, shape index: {0}]
  %s5 = inlined_call_operand.hbm [shape: s32[16,128], index: 5, kind: output, shape index: {1}]
  %6 = xla_tuple %s4, %s5
  %s7 = sld [smem:[#allocation0]]
  $region57: #{tpu_custom_call.1} parent=0
    _
  %s9 = ssub.s32 1, %s7
  %s10 = scalar_select 0, %s9, %s7
  $region1: #{tpu_custom_call.1} parent=0
    #allocation2 [shape = 'u8[8192]{0}', space=vmem, size = 0x2000, scoped, tag = 'output window, operand 0']
    #allocation3 [shape = 's32[2]{0}', space=sflag, size = 0x8, scoped, tag = 'scoped memory for tpu_custom_call.1']
    #allocation4 [shape = 'u8[8192]{0}', space=vmem, size = 0x2000, scoped, tag = 'output window, operand 1']
    #allocation5 [shape = 's32[2]{0}', space=sflag, size = 0x8, scoped, tag = 'scoped memory for tpu_custom_call.1']
    %11 = vsyncpa [#allocation3], 0
    %s12 = scalar_lea.sflag [#allocation3], 1
    %13 = vsyncpa %s12, 0
    %14 = vsyncpa [#allocation5], 0
    %s15 = scalar_lea.sflag [#allocation5], 1
    %16 = vsyncpa %s15, 0
    loop: start=0, step=1, limit=4
    $region2: #{tpu_custom_call.1} parent=1 // loop_pre_header
      _
    $region3: #{tpu_custom_call.1} parent=1 // loop_header
      %s18 = sphi 0, %s22
      %p19 = scmp.ge.s32.totalorder %s18, 4
      %s28 = sphi 0, %s30
      %s31 = sphi 0, %s28
      %s32 = sphi 0, %s31
      %s48 = sphi 0, %s32
      %s52 = sphi 0, %s52
      %s54 = sphi 0, %s52
      %s55 = sphi 0, %s54
      %s69 = sphi 0, %s55
      %s73 = sphi 0, %s73
      %s75 = sphi 0, %s73
      %s76 = sphi 0, %s75
      %s90 = sphi 0, %s76
      %s94 = sphi 0, %s94
      %s96 = sphi 0, %s94
      %s97 = sphi 0, %s96
      %s111 = sphi 0, %s97
      %s117 = sphi 0, %s119
      %s120 = sphi 0, %s117
      %s121 = sphi 0, %s120
      %s137 = sphi 0, %s121
      %s143 = sphi 0, %s145
      %s146 = sphi 0, %s143
      %s147 = sphi 0, %s146
      %s163 = sphi 0, %s147
    $region4: #{tpu_custom_call.1} parent=1 // loop_header_branch
      %21 = sbr.rel (%p19) target = $region8
    $region5: #{tpu_custom_call.1} parent=1 // loop_body
      %s23 = ssub.s32 %s18, 1
      %s24 = ssub.s32 %s18, 2
      %s25 = sadd.s32 %s18, 1
      %s26 = ssub.s32 %s18, %s25
      %p27 = scmp.eq.s32.totalorder %s26, 0
      %s29 = sadd.s32 %s28, 1
      %s30 = scalar_select %p27, %s28, %s29
      %p33 = pneg %p27
      %p34 = scmp.eq.s32.totalorder %s18, 1
      %p35 = por %p33, %p34
      %p36 = scmp.ne.s32.totalorder %s28, %s31
      %p37 = scmp.eq.s32.totalorder %s18, 0
      %p38 = por %p36, %p37
      %p39 = scmp.ne.s32.totalorder %s28, %s31
      %p40 = scmp.eq.s32.totalorder %s23, 1
      %p41 = por %p39, %p40
      %p42 = scmp.ne.s32.totalorder %s31, %s32
      %p43 = scmp.eq.s32.totalorder %s23, 0
      %p44 = por %p42, %p43
      %p45 = scmp.ne.s32.totalorder %s31, %s32
      %p46 = scmp.eq.s32.totalorder %s24, 1
      %p47 = por %p45, %p46
      %p49 = scmp.ne.s32.totalorder %s32, %s48
      %p50 = scmp.eq.s32.totalorder %s24, 0
      %p51 = por %p49, %p50
      %s53 = sadd.s32 %s52, 1
      %p56 = scmp.eq.s32.totalorder %s18, 1
      %p57 = scmp.ne.s32.totalorder %s52, %s54
      %p58 = scmp.eq.s32.totalorder %s18, 0
      %p59 = por %p57, %p58
      %p60 = scmp.ne.s32.totalorder %s52, %s54
      %p61 = scmp.eq.s32.totalorder %s23, 1
      %p62 = por %p60, %p61
      %p63 = scmp.ne.s32.totalorder %s54, %s55
      %p64 = scmp.eq.s32.totalorder %s23, 0
      %p65 = por %p63, %p64
      %p66 = scmp.ne.s32.totalorder %s54, %s55
      %p67 = scmp.eq.s32.totalorder %s24, 1
      %p68 = por %p66, %p67
      %p70 = scmp.ne.s32.totalorder %s55, %s69
      %p71 = scmp.eq.s32.totalorder %s24, 0
      %p72 = por %p70, %p71
      %s74 = sadd.s32 %s73, 1
      %p77 = scmp.eq.s32.totalorder %s18, 1
      %p78 = scmp.ne.s32.totalorder %s73, %s75
      %p79 = scmp.eq.s32.totalorder %s18, 0
      %p80 = por %p78, %p79
      %p81 = scmp.ne.s32.totalorder %s73, %s75
      %p82 = scmp.eq.s32.totalorder %s23, 1
      %p83 = por %p81, %p82
      %p84 = scmp.ne.s32.totalorder %s75, %s76
      %p85 = scmp.eq.s32.totalorder %s23, 0
      %p86 = por %p84, %p85
      %p87 = scmp.ne.s32.totalorder %s75, %s76
      %p88 = scmp.eq.s32.totalorder %s24, 1
      %p89 = por %p87, %p88
      %p91 = scmp.ne.s32.totalorder %s76, %s90
      %p92 = scmp.eq.s32.totalorder %s24, 0
      %p93 = por %p91, %p92
      %s95 = sadd.s32 %s94, 1
      %p98 = scmp.eq.s32.totalorder %s18, 1
      %p99 = scmp.ne.s32.totalorder %s94, %s96
      %p100 = scmp.eq.s32.totalorder %s18, 0
      %p101 = por %p99, %p100
      %p102 = scmp.ne.s32.totalorder %s94, %s96
      %p103 = scmp.eq.s32.totalorder %s23, 1
      %p104 = por %p102, %p103
      %p105 = scmp.ne.s32.totalorder %s96, %s97
      %p106 = scmp.eq.s32.totalorder %s23, 0
      %p107 = por %p105, %p106
      %p108 = scmp.ne.s32.totalorder %s96, %s97
      %p109 = scmp.eq.s32.totalorder %s24, 1
      %p110 = por %p108, %p109
      %p112 = scmp.ne.s32.totalorder %s97, %s111
      %p113 = scmp.eq.s32.totalorder %s24, 0
      %p114 = por %p112, %p113
      %s115 = ssub.s32 %s18, %s25
      %p116 = scmp.eq.s32.totalorder %s115, 0
      %s118 = sadd.s32 %s117, 1
      %s119 = scalar_select %p116, %s117, %s118
      %p122 = pneg %p116
      %p123 = scmp.eq.s32.totalorder %s18, 1
      %p124 = por %p122, %p123
      %p125 = scmp.ne.s32.totalorder %s117, %s120
      %p126 = scmp.eq.s32.totalorder %s18, 0
      %p127 = por %p125, %p126
      %p128 = scmp.ne.s32.totalorder %s117, %s120
      %p129 = scmp.eq.s32.totalorder %s23, 1
      %p130 = por %p128, %p129
      %p131 = scmp.ne.s32.totalorder %s120, %s121
      %p132 = scmp.eq.s32.totalorder %s23, 0
      %p133 = por %p131, %p132
      %p134 = scmp.ne.s32.totalorder %s120, %s121
      %p135 = scmp.eq.s32.totalorder %s24, 1
      %p136 = por %p134, %p135
      %p138 = scmp.ne.s32.totalorder %s121, %s137
      %p139 = scmp.eq.s32.totalorder %s24, 0
      %p140 = por %p138, %p139
      %s141 = ssub.s32 %s18, %s25
      %p142 = scmp.eq.s32.totalorder %s141, 0
      %s144 = sadd.s32 %s143, 1
      %s145 = scalar_select %p142, %s143, %s144
      %p148 = pneg %p142
      %p149 = scmp.eq.s32.totalorder %s18, 1
      %p150 = por %p148, %p149
      %p151 = scmp.ne.s32.totalorder %s143, %s146
      %p152 = scmp.eq.s32.totalorder %s18, 0
      %p153 = por %p151, %p152
      %p154 = scmp.ne.s32.totalorder %s143, %s146
      %p155 = scmp.eq.s32.totalorder %s23, 1
      %p156 = por %p154, %p155
      %p157 = scmp.ne.s32.totalorder %s146, %s147
      %p158 = scmp.eq.s32.totalorder %s23, 0
      %p159 = por %p157, %p158
      %p160 = scmp.ne.s32.totalorder %s146, %s147
      %p161 = scmp.eq.s32.totalorder %s24, 1
      %p162 = por %p160, %p161
      %p164 = scmp.ne.s32.totalorder %s147, %s163
      %p165 = scmp.eq.s32.totalorder %s24, 0
      %p166 = por %p164, %p165
      %p167 = scmp.le.s32.totalorder 1, %s18
      %p168 = scmp.lt.s32.totalorder %s18, 3
      %p169 = pnand %p167, %p168
      %p170 = pneg %p169
      // Predicated region
      $region9: #{tpu_custom_call.1} parent=5 // pred_check
        _
      $region10: #{tpu_custom_call.1} parent=5 // pred_check_branch
        %172 = sbr.rel (%p169) target = $region12
      $region11: #{tpu_custom_call.1} parent=5 // pred_region
        %s173 = ssub.s32 %s18, 1
        // Predicated region
        $region13: #{tpu_custom_call.1} parent=11 // pred_check
          %p174 = pneg %p65
        $region14: #{tpu_custom_call.1} parent=11 // pred_check_branch
          %176 = sbr.rel (%p174) target = $region16
        $region15: #{tpu_custom_call.1} parent=11 // pred_region
          _
        $region16: #{tpu_custom_call.1} parent=11 // pred_fallthru
          _
        // Predicated region
        $region17: #{tpu_custom_call.1} parent=11 // pred_check
          %p177 = pneg %p86
        $region18: #{tpu_custom_call.1} parent=11 // pred_check_branch
          %179 = sbr.rel (%p177) target = $region20
        $region19: #{tpu_custom_call.1} parent=11 // pred_region
          _
        $region20: #{tpu_custom_call.1} parent=11 // pred_fallthru
          _
        // Predicated region
        $region21: #{tpu_custom_call.1} parent=11 // pred_check
          %p180 = pneg %p107
        $region22: #{tpu_custom_call.1} parent=11 // pred_check_branch
          %182 = sbr.rel (%p180) target = $region24
        $region23: #{tpu_custom_call.1} parent=11 // pred_region
          _
        $region24: #{tpu_custom_call.1} parent=11 // pred_fallthru
          _
      $region12: #{tpu_custom_call.1} parent=5 // pred_fallthru
        _
      %p183 = scmp.lt.s32.totalorder %s18, 2
      // Predicated region
      $region25: #{tpu_custom_call.1} parent=5 // pred_check
        %p184 = pneg %p183
      $region26: #{tpu_custom_call.1} parent=5 // pred_check_branch
        %186 = sbr.rel (%p184) target = $region28
      $region27: #{tpu_custom_call.1} parent=5 // pred_region
        // Predicated region
        $region29: #{tpu_custom_call.1} parent=27 // pred_check
          %p187 = pneg %p38
        $region30: #{tpu_custom_call.1} parent=27 // pred_check_branch
          %189 = sbr.rel (%p187) target = $region32
        $region31: #{tpu_custom_call.1} parent=27 // pred_region
          %s190 = smul.u32 8, %s18
          %p191 = scmp.lt.s32.totalorder %s190, 15
          %s192 = scalar_select %p191, %s190, 15
          %s193 = smul.addr %s192, 3
          %s194 = smul.addr %s193, 4
          %s195 = scalar_lea.vmem %s0, %s194
          %s196 = smul.u32 8, %s18
        $region32: #{tpu_custom_call.1} parent=27 // pred_fallthru
          _
      $region28: #{tpu_custom_call.1} parent=5 // pred_fallthru
        _
      %p197 = scmp.le.s32.totalorder 1, %s18
      %p198 = scmp.lt.s32.totalorder %s18, 3
      %p199 = pnand %p197, %p198
      %p200 = pneg %p199
      // Predicated region
      $region33: #{tpu_custom_call.1} parent=5 // pred_check
        _
      $region34: #{tpu_custom_call.1} parent=5 // pred_check_branch
        %202 = sbr.rel (%p199) target = $region36
      $region35: #{tpu_custom_call.1} parent=5 // pred_region
        %s203 = ssub.s32 %s18, 1
        %s204 = smul.u32 8, %s23
        %p205 = scmp.lt.s32.totalorder %s204, 15
        %s206 = scalar_select %p205, %s204, 15
        %s207 = smul.addr %s206, 3
        %s208 = smul.addr %s207, 4
        %s209 = scalar_lea.vmem %s0, %s208
        %p210 = pneg %p44
        %p211 = pneg %p41
        %p212 = pneg %p65
        %p213 = pneg %p62
        %p214 = pneg %p86
        %p215 = pneg %p83
        %p216 = pneg %p107
        %p217 = pneg %p104
        %p218 = pneg %p133
        %p219 = pneg %p130
        %s220 = sand.u32 %s120, 1
        %s221 = scalar_lea.sflag [#allocation3], %s220
        %s222 = sand.u32 %s120, 1
        %s223 = smul.addr %s222, 8
        %s224 = scalar_lea.vmem [#allocation2], %s223
        %p225 = pneg %p159
        %p226 = pneg %p156
        %s227 = sand.u32 %s146, 1
        %s228 = scalar_lea.sflag [#allocation5], %s227
        %s229 = sand.u32 %s146, 1
        %s230 = smul.addr %s229, 8
        %s231 = scalar_lea.vmem [#allocation4], %s230
        %s232 = smul.u32 8, %s23
        %p233 = scmp.lt.s32.totalorder %s232, 15
        %s234 = scalar_select %p233, %s232, 15
        %s235 = smul.addr %s234, 3
        %s236 = smul.addr %s235, 4
        %s237 = scalar_lea.vmem %s0, %s236
        %s238 = smul.u32 8, %s23
        %v240 = vld [vmem:[%s237] sm:$0xf]
        %v241 = vld [vmem:[%s237 + $0x4] sm:$0xf]
        %v242 = vld [vmem:[%s237 + $0x8] sm:$0x3]
        %v243 = vld [vmem:[%s237 + $0xc] sm:$0xf]
        %v244 = vld [vmem:[%s237 + $0x10] sm:$0xf]
        %v245 = vld [vmem:[%s237 + $0x14] sm:$0x3]
        %v246 = vld [vmem:[%s237 + $0x18] sm:$0xf]
        %v247 = vld [vmem:[%s237 + $0x1c] sm:$0xf]
        %v248 = vld [vmem:[%s237 + $0x20] sm:$0x3]
        %v249 = vld [vmem:[%s237 + $0x24] sm:$0xf]
        %v250 = vld [vmem:[%s237 + $0x28] sm:$0xf]
        %v251 = vld [vmem:[%s237 + $0x2c] sm:$0x3]
        %v252 = vld [vmem:[%s237 + $0x30] sm:$0xf]
        %v253 = vld [vmem:[%s237 + $0x34] sm:$0xf]
        %v254 = vld [vmem:[%s237 + $0x38] sm:$0x3]
        %v255 = vld [vmem:[%s237 + $0x3c] sm:$0xf]
        %v256 = vld [vmem:[%s237 + $0x40] sm:$0xf]
        %v257 = vld [vmem:[%s237 + $0x44] sm:$0x3]
        %v258 = vld [vmem:[%s237 + $0x48] sm:$0xf]
        %v259 = vld [vmem:[%s237 + $0x4c] sm:$0xf]
        %v260 = vld [vmem:[%s237 + $0x50] sm:$0x3]
        %v261 = vld [vmem:[%s237 + $0x54] sm:$0xf]
        %v262 = vld [vmem:[%s237 + $0x58] sm:$0xf]
        %v263 = vld [vmem:[%s237 + $0x5c] sm:$0x3]
        %v264 = vld [vmem:[%s2] sm:$0x1]
        %v266 = vlaneseq
        %v267 = vshrl.u32 %v266, 7
        %v268 = vsub.s32 0, %v267
        %v269 = vrot.slane %v264, %v268
        %v271 = vadd.f32 %v269, 0.0
        %v272 = vld [vmem:[%s1] sm:$0xf]
        %v273 = vld [vmem:[%s1 + $0x4] sm:$0xf]
        %v274 = vld [vmem:[%s1 + $0x8] sm:$0xf]
        %v275 = vld [vmem:[%s1 + $0xc] sm:$0xf]
        %v301 = vunpack.c.l.s4 1983009808
        %v302 = vunpack.c.0.s8 %v301
        %v303 = vlaneseq
        %v304 = vshrl.u32 %v303, 7
        %v305 = vsub.s32 %v302, %v304
        %v306 = vrot.slane %v240, %v305
        %v307 = vcombine.high %v306, %v306
        %v309 = vunpack.c.l.s4 1983009808
        %v310 = vunpack.c.0.s8 %v309
        %v311 = vlaneseq
        %v312 = vshrl.u32 %v311, 7
        %v313 = vsub.s32 %v310, %v312
        %v314 = vrot.slane %v241, %v313
        %v315 = vcombine.high %v314, %v314
        %v317 = vunpack.c.l.s4 1983009808
        %v318 = vunpack.c.0.s8 %v317
        %v319 = vlaneseq
        %v320 = vshrl.u32 %v319, 7
        %v321 = vsub.s32 %v318, %v320
        %v322 = vrot.slane %v242, %v321
        %v324 = vunpack.c.l.s4 1983009808
        %v325 = vunpack.c.0.s8 %v324
        %v326 = vlaneseq
        %v327 = vshrl.u32 %v326, 7
        %v328 = vsub.s32 %v325, %v327
        %v329 = vrot.slane %v243, %v328
        %v330 = vcombine.high %v329, %v329
        %v332 = vunpack.c.l.s4 1983009808
        %v333 = vunpack.c.0.s8 %v332
        %v334 = vlaneseq
        %v335 = vshrl.u32 %v334, 7
        %v336 = vsub.s32 %v333, %v335
        %v337 = vrot.slane %v244, %v336
        %v338 = vcombine.high %v337, %v337
        %v340 = vunpack.c.l.s4 1983009808
        %v341 = vunpack.c.0.s8 %v340
        %v342 = vlaneseq
        %v343 = vshrl.u32 %v342, 7
        %v344 = vsub.s32 %v341, %v343
        %v345 = vrot.slane %v245, %v344
        %v347 = vunpack.c.l.s4 1983009808
        %v348 = vunpack.c.0.s8 %v347
        %v349 = vlaneseq
        %v350 = vshrl.u32 %v349, 7
        %v351 = vsub.s32 %v348, %v350
        %v352 = vrot.slane %v246, %v351
        %v353 = vcombine.high %v352, %v352
        %v355 = vunpack.c.l.s4 1983009808
        %v356 = vunpack.c.0.s8 %v355
        %v357 = vlaneseq
        %v358 = vshrl.u32 %v357, 7
        %v359 = vsub.s32 %v356, %v358
        %v360 = vrot.slane %v247, %v359
        %v361 = vcombine.high %v360, %v360
        %v363 = vunpack.c.l.s4 1983009808
        %v364 = vunpack.c.0.s8 %v363
        %v365 = vlaneseq
        %v366 = vshrl.u32 %v365, 7
        %v367 = vsub.s32 %v364, %v366
        %v368 = vrot.slane %v248, %v367
        %v370 = vunpack.c.l.s4 1983009808
        %v371 = vunpack.c.0.s8 %v370
        %v372 = vlaneseq
        %v373 = vshrl.u32 %v372, 7
        %v374 = vsub.s32 %v371, %v373
        %v375 = vrot.slane %v249, %v374
        %v376 = vcombine.high %v375, %v375
        %v378 = vunpack.c.l.s4 1983009808
        %v379 = vunpack.c.0.s8 %v378
        %v380 = vlaneseq
        %v381 = vshrl.u32 %v380, 7
        %v382 = vsub.s32 %v379, %v381
        %v383 = vrot.slane %v250, %v382
        %v384 = vcombine.high %v383, %v383
        %v386 = vunpack.c.l.s4 1983009808
        %v387 = vunpack.c.0.s8 %v386
        %v388 = vlaneseq
        %v389 = vshrl.u32 %v388, 7
        %v390 = vsub.s32 %v387, %v389
        %v391 = vrot.slane %v251, %v390
        %v393 = vunpack.c.l.s4 1983009808
        %v394 = vunpack.c.0.s8 %v393
        %v395 = vlaneseq
        %v396 = vshrl.u32 %v395, 7
        %v397 = vsub.s32 %v394, %v396
        %v398 = vrot.slane %v252, %v397
        %v399 = vcombine.high %v398, %v398
        %v401 = vunpack.c.l.s4 1983009808
        %v402 = vunpack.c.0.s8 %v401
        %v403 = vlaneseq
        %v404 = vshrl.u32 %v403, 7
        %v405 = vsub.s32 %v402, %v404
        %v406 = vrot.slane %v253, %v405
        %v407 = vcombine.high %v406, %v406
        %v409 = vunpack.c.l.s4 1983009808
        %v410 = vunpack.c.0.s8 %v409
        %v411 = vlaneseq
        %v412 = vshrl.u32 %v411, 7
        %v413 = vsub.s32 %v410, %v412
        %v414 = vrot.slane %v254, %v413
        %v416 = vunpack.c.l.s4 1983009808
        %v417 = vunpack.c.0.s8 %v416
        %v418 = vlaneseq
        %v419 = vshrl.u32 %v418, 7
        %v420 = vsub.s32 %v417, %v419
        %v421 = vrot.slane %v255, %v420
        %v422 = vcombine.high %v421, %v421
        %v424 = vunpack.c.l.s4 1983009808
        %v425 = vunpack.c.0.s8 %v424
        %v426 = vlaneseq
        %v427 = vshrl.u32 %v426, 7
        %v428 = vsub.s32 %v425, %v427
        %v429 = vrot.slane %v256, %v428
        %v430 = vcombine.high %v429, %v429
        %v432 = vunpack.c.l.s4 1983009808
        %v433 = vunpack.c.0.s8 %v432
        %v434 = vlaneseq
        %v435 = vshrl.u32 %v434, 7
        %v436 = vsub.s32 %v433, %v435
        %v437 = vrot.slane %v257, %v436
        %v439 = vunpack.c.l.s4 1983009808
        %v440 = vunpack.c.0.s8 %v439
        %v441 = vlaneseq
        %v442 = vshrl.u32 %v441, 7
        %v443 = vsub.s32 %v440, %v442
        %v444 = vrot.slane %v258, %v443
        %v445 = vcombine.high %v444, %v444
        %v447 = vunpack.c.l.s4 1983009808
        %v448 = vunpack.c.0.s8 %v447
        %v449 = vlaneseq
        %v450 = vshrl.u32 %v449, 7
        %v451 = vsub.s32 %v448, %v450
        %v452 = vrot.slane %v259, %v451
        %v453 = vcombine.high %v452, %v452
        %v455 = vunpack.c.l.s4 1983009808
        %v456 = vunpack.c.0.s8 %v455
        %v457 = vlaneseq
        %v458 = vshrl.u32 %v457, 7
        %v459 = vsub.s32 %v456, %v458
        %v460 = vrot.slane %v260, %v459
        %v462 = vunpack.c.l.s4 1983009808
        %v463 = vunpack.c.0.s8 %v462
        %v464 = vlaneseq
        %v465 = vshrl.u32 %v464, 7
        %v466 = vsub.s32 %v463, %v465
        %v467 = vrot.slane %v261, %v466
        %v468 = vcombine.high %v467, %v467
        %v470 = vunpack.c.l.s4 1983009808
        %v471 = vunpack.c.0.s8 %v470
        %v472 = vlaneseq
        %v473 = vshrl.u32 %v472, 7
        %v474 = vsub.s32 %v471, %v473
        %v475 = vrot.slane %v262, %v474
        %v476 = vcombine.high %v475, %v475
        %v478 = vunpack.c.l.s4 1983009808
        %v479 = vunpack.c.0.s8 %v478
        %v480 = vlaneseq
        %v481 = vshrl.u32 %v480, 7
        %v482 = vsub.s32 %v479, %v481
        %v483 = vrot.slane %v263, %v482
        %v484 = vcombine.low %v306, %v307
        %v485 = vcombine.low %v314, %v315
        %v487 = vunpack.c.l.s4 1983009808
        %v488 = vunpack.c.0.s8 %v487
        %v489 = vlaneseq
        %v490 = vshrl.u32 %v489, 7
        %v491 = vsub.s32 %v488, %v490
        %v492 = vrot.slane %v484, %v491
        %v494 = vunpack.c.l.s4 1983009808
        %v495 = vunpack.c.0.s8 %v494
        %v496 = vlaneseq
        %v497 = vshrl.u32 %v496, 7
        %v498 = vsub.s32 %v495, %v497
        %v499 = vrot.slane %v485, %v498
        %v500 = vcombine.low %v492, %v499
        %v501 = vcombine.low %v322, %v329
        %v502 = vcombine.low %v330, %v337
        %v504 = vunpack.c.l.s4 1983009808
        %v505 = vunpack.c.0.s8 %v504
        %v506 = vlaneseq
        %v507 = vshrl.u32 %v506, 7
        %v508 = vsub.s32 %v505, %v507
        %v509 = vrot.slane %v501, %v508
        %v511 = vunpack.c.l.s4 1983009808
        %v512 = vunpack.c.0.s8 %v511
        %v513 = vlaneseq
        %v514 = vshrl.u32 %v513, 7
        %v515 = vsub.s32 %v512, %v514
        %v516 = vrot.slane %v502, %v515
        %v517 = vcombine.low %v509, %v516
        %v518 = vcombine.low %v338, %v345
        %v519 = vcombine.low %v352, %v353
        %v521 = vunpack.c.l.s4 1983009808
        %v522 = vunpack.c.0.s8 %v521
        %v523 = vlaneseq
        %v524 = vshrl.u32 %v523, 7
        %v525 = vsub.s32 %v522, %v524
        %v526 = vrot.slane %v518, %v525
        %v528 = vunpack.c.l.s4 1983009808
        %v529 = vunpack.c.0.s8 %v528
        %v530 = vlaneseq
        %v531 = vshrl.u32 %v530, 7
        %v532 = vsub.s32 %v529, %v531
        %v533 = vrot.slane %v519, %v532
        %v534 = vcombine.low %v526, %v533
        %v535 = vcombine.low %v360, %v361
        %v536 = vcombine.low %v368, %v375
        %v538 = vunpack.c.l.s4 1983009808
        %v539 = vunpack.c.0.s8 %v538
        %v540 = vlaneseq
        %v541 = vshrl.u32 %v540, 7
        %v542 = vsub.s32 %v539, %v541
        %v543 = vrot.slane %v535, %v542
        %v545 = vunpack.c.l.s4 1983009808
        %v546 = vunpack.c.0.s8 %v545
        %v547 = vlaneseq
        %v548 = vshrl.u32 %v547, 7
        %v549 = vsub.s32 %v546, %v548
        %v550 = vrot.slane %v536, %v549
        %v551 = vcombine.low %v543, %v550
        %v552 = vcombine.low %v376, %v383
        %v553 = vcombine.low %v384, %v391
        %v555 = vunpack.c.l.s4 1983009808
        %v556 = vunpack.c.0.s8 %v555
        %v557 = vlaneseq
        %v558 = vshrl.u32 %v557, 7
        %v559 = vsub.s32 %v556, %v558
        %v560 = vrot.slane %v552, %v559
        %v562 = vunpack.c.l.s4 1983009808
        %v563 = vunpack.c.0.s8 %v562
        %v564 = vlaneseq
        %v565 = vshrl.u32 %v564, 7
        %v566 = vsub.s32 %v563, %v565
        %v567 = vrot.slane %v553, %v566
        %v568 = vcombine.low %v560, %v567
        %v569 = vcombine.low %v398, %v399
        %v570 = vcombine.low %v406, %v407
        %v572 = vunpack.c.l.s4 1983009808
        %v573 = vunpack.c.0.s8 %v572
        %v574 = vlaneseq
        %v575 = vshrl.u32 %v574, 7
        %v576 = vsub.s32 %v573, %v575
        %v577 = vrot.slane %v569, %v576
        %v579 = vunpack.c.l.s4 1983009808
        %v580 = vunpack.c.0.s8 %v579
        %v581 = vlaneseq
        %v582 = vshrl.u32 %v581, 7
        %v583 = vsub.s32 %v580, %v582
        %v584 = vrot.slane %v570, %v583
        %v585 = vcombine.low %v577, %v584
        %v586 = vcombine.low %v414, %v421
        %v587 = vcombine.low %v422, %v429
        %v589 = vunpack.c.l.s4 1983009808
        %v590 = vunpack.c.0.s8 %v589
        %v591 = vlaneseq
        %v592 = vshrl.u32 %v591, 7
        %v593 = vsub.s32 %v590, %v592
        %v594 = vrot.slane %v586, %v593
        %v596 = vunpack.c.l.s4 1983009808
        %v597 = vunpack.c.0.s8 %v596
        %v598 = vlaneseq
        %v599 = vshrl.u32 %v598, 7
        %v600 = vsub.s32 %v597, %v599
        %v601 = vrot.slane %v587, %v600
        %v602 = vcombine.low %v594, %v601
        %v603 = vcombine.low %v430, %v437
        %v604 = vcombine.low %v444, %v445
        %v606 = vunpack.c.l.s4 1983009808
        %v607 = vunpack.c.0.s8 %v606
        %v608 = vlaneseq
        %v609 = vshrl.u32 %v608, 7
        %v610 = vsub.s32 %v607, %v609
        %v611 = vrot.slane %v603, %v610
        %v613 = vunpack.c.l.s4 1983009808
        %v614 = vunpack.c.0.s8 %v613
        %v615 = vlaneseq
        %v616 = vshrl.u32 %v615, 7
        %v617 = vsub.s32 %v614, %v616
        %v618 = vrot.slane %v604, %v617
        %v619 = vcombine.low %v611, %v618
        %v620 = vcombine.low %v452, %v453
        %v621 = vcombine.low %v460, %v467
        %v623 = vunpack.c.l.s4 1983009808
        %v624 = vunpack.c.0.s8 %v623
        %v625 = vlaneseq
        %v626 = vshrl.u32 %v625, 7
        %v627 = vsub.s32 %v624, %v626
        %v628 = vrot.slane %v620, %v627
        %v630 = vunpack.c.l.s4 1983009808
        %v631 = vunpack.c.0.s8 %v630
        %v632 = vlaneseq
        %v633 = vshrl.u32 %v632, 7
        %v634 = vsub.s32 %v631, %v633
        %v635 = vrot.slane %v621, %v634
        %v636 = vcombine.low %v628, %v635
        %v637 = vcombine.low %v468, %v475
        %v638 = vcombine.low %v476, %v483
        %v640 = vunpack.c.l.s4 1983009808
        %v641 = vunpack.c.0.s8 %v640
        %v642 = vlaneseq
        %v643 = vshrl.u32 %v642, 7
        %v644 = vsub.s32 %v641, %v643
        %v645 = vrot.slane %v637, %v644
        %v647 = vunpack.c.l.s4 1983009808
        %v648 = vunpack.c.0.s8 %v647
        %v649 = vlaneseq
        %v650 = vshrl.u32 %v649, 7
        %v651 = vsub.s32 %v648, %v650
        %v652 = vrot.slane %v638, %v651
        %v653 = vcombine.low %v645, %v652
        %v658 = vunpack.c.l.b16 %v272
        %v659 = vunpack.c.l.b16 %v273
        %v660 = vunpack.c.l.b16 %v274
        %v661 = vunpack.c.l.b16 %v275
        %v662 = vpack.c.b16 %v659, %v658
        %v663 = vpack.c.b16 %v661, %v660
        %vm666 = vcmask 261120
        %v668 = vsel %vm666, %v500, 0
        %v671 = vsel %vm666, %v517, 0
        %v674 = vsel %vm666, %v534, 0
        %v677 = vsel %vm666, %v551, 0
        %v680 = vsel %vm666, %v568, 0
        %v683 = vsel %vm666, %v585, 0
        %v686 = vsel %vm666, %v602, 0
        %v689 = vsel %vm666, %v619, 0
        %v692 = vsel %vm666, %v636, 0
        %v695 = vsel %vm666, %v653, 0
        %697 = vmatprep.subr.bf16.mxu0 0
        %698 = vmatpush1.bf16.msra.mxu0 %v662
        %699 = vmatprep.subr.bf16.mxu0 0
        %700 = vmatpush1.bf16.msra.mxu0 %v663
        %701 = vmatprep.subr.bf16.mxu0 0
        %702 = vmatpush1.bf16.msra.mxu0 0
        %703 = vmatprep.subr.bf16.mxu0 0
        %704 = vmatpush1.bf16.msra.mxu0 0
        %705 = vmatprep.subr.bf16.mxu0 0
        %706 = vmatpush1.bf16.msra.mxu0 0
        %707 = vmatprep.subr.bf16.mxu0 0
        %708 = vmatpush1.bf16.msra.mxu0 0
        %709 = vmatprep.subr.bf16.mxu0 0
        %710 = vmatpush1.bf16.msra.mxu0 0
        %711 = vmatprep.subr.bf16.mxu0 0
        %712 = vmatpush1.bf16.msra.mxu0 0
        %713 = vmatprep.subr.bf16.mxu0 0
        %714 = vmatpush1.bf16.msra.mxu0 0
        %715 = vmatprep.subr.bf16.mxu0 0
        %716 = vmatpush1.bf16.msra.mxu0 0
        %717 = vmatprep.subr.bf16.mxu0 0
        %718 = vmatpush1.bf16.msra.mxu0 0
        %719 = vmatprep.subr.bf16.mxu0 0
        %720 = vmatpush1.bf16.msra.mxu0 0
        %721 = vmatprep.subr.bf16.mxu0 0
        %722 = vmatpush1.bf16.msra.mxu0 0
        %723 = vmatprep.subr.bf16.mxu0 0
        %724 = vmatpush1.bf16.msra.mxu0 0
        %725 = vmatprep.subr.bf16.mxu0 0
        %726 = vmatpush1.bf16.msra.mxu0 0
        %727 = vmatprep.subr.bf16.mxu0 0
        %728 = vmatpush1.bf16.msra.mxu0 0
        %729 = vmatprep.mubr.bf16.mxu0 0
        %730 = vmatmul.mubr.bf16.gmra.mrb[0].mxu0 %v668
        %v731 = vpop.f32.mrb[0].mxu0
        %v732 = vadd.f32 0.0, %v731
        %v733 = vpop.f32.mrb[0].mxu0
        %v734 = vpop.f32.mrb[0].mxu0
        %v735 = vadd.f32 0.0, %v734
        %v736 = vpop.f32.mrb[0].mxu0
        %737 = vmatprep.mubr.bf16.mxu0 0
        %738 = vmatmul.mubr.bf16.gmra.mrb[0].mxu0 %v671
        %v739 = vpop.f32.mrb[0].mxu0
        %v740 = vadd.f32 0.0, %v739
        %v741 = vpop.f32.mrb[0].mxu0
        %v742 = vpop.f32.mrb[0].mxu0
        %v743 = vadd.f32 0.0, %v742
        %v744 = vpop.f32.mrb[0].mxu0
        %745 = vmatprep.mubr.bf16.mxu0 0
        %746 = vmatmul.mubr.bf16.gmra.mrb[0].mxu0 %v674
        %v747 = vpop.f32.mrb[0].mxu0
        %v748 = vadd.f32 0.0, %v747
        %v749 = vpop.f32.mrb[0].mxu0
        %v750 = vpop.f32.mrb[0].mxu0
        %v751 = vadd.f32 0.0, %v750
        %v752 = vpop.f32.mrb[0].mxu0
        %753 = vmatprep.mubr.bf16.mxu0 0
        %754 = vmatmul.mubr.bf16.gmra.mrb[0].mxu0 %v677
        %v755 = vpop.f32.mrb[0].mxu0
        %v756 = vadd.f32 0.0, %v755
        %v757 = vpop.f32.mrb[0].mxu0
        %v758 = vpop.f32.mrb[0].mxu0
        %v759 = vadd.f32 0.0, %v758
        %v760 = vpop.f32.mrb[0].mxu0
        %761 = vmatprep.mubr.bf16.mxu0 0
        %762 = vmatmul.mubr.bf16.gmra.mrb[0].mxu0 %v680
        %v763 = vpop.f32.mrb[0].mxu0
        %v764 = vadd.f32 0.0, %v763
        %v765 = vpop.f32.mrb[0].mxu0
        %v766 = vpop.f32.mrb[0].mxu0
        %v767 = vadd.f32 0.0, %v766
        %v768 = vpop.f32.mrb[0].mxu0
        %769 = vmatprep.mubr.bf16.mxu0 0
        %770 = vmatmul.mubr.bf16.gmra.mrb[0].mxu0 %v683
        %v771 = vpop.f32.mrb[0].mxu0
        %v772 = vadd.f32 0.0, %v771
        %v773 = vpop.f32.mrb[0].mxu0
        %v774 = vpop.f32.mrb[0].mxu0
        %v775 = vadd.f32 0.0, %v774
        %v776 = vpop.f32.mrb[0].mxu0
        %777 = vmatprep.mubr.bf16.mxu0 0
        %778 = vmatmul.mubr.bf16.gmra.mrb[0].mxu0 %v686
        %v779 = vpop.f32.mrb[0].mxu0
        %v780 = vadd.f32 0.0, %v779
        %v781 = vpop.f32.mrb[0].mxu0
        %v782 = vpop.f32.mrb[0].mxu0
        %v783 = vadd.f32 0.0, %v782
        %v784 = vpop.f32.mrb[0].mxu0
        %785 = vmatprep.mubr.bf16.mxu0 0
        %786 = vmatmul.mubr.bf16.gmra.mrb[0].mxu0 %v689
        %v787 = vpop.f32.mrb[0].mxu0
        %v788 = vadd.f32 0.0, %v787
        %v789 = vpop.f32.mrb[0].mxu0
        %v790 = vpop.f32.mrb[0].mxu0
        %v791 = vadd.f32 0.0, %v790
        %v792 = vpop.f32.mrb[0].mxu0
        %793 = vmatprep.mubr.bf16.mxu0 0
        %794 = vmatmul.mubr.bf16.gmra.mrb[0].mxu0 %v692
        %v795 = vpop.f32.mrb[0].mxu0
        %v796 = vadd.f32 0.0, %v795
        %v797 = vpop.f32.mrb[0].mxu0
        %v798 = vpop.f32.mrb[0].mxu0
        %v799 = vadd.f32 0.0, %v798
        %v800 = vpop.f32.mrb[0].mxu0
        %801 = vmatprep.mubr.bf16.mxu0 0
        %802 = vmatmul.mubr.bf16.gmra.mrb[0].mxu0 %v695
        %v803 = vpop.f32.mrb[0].mxu0
        %v804 = vadd.f32 0.0, %v803
        %v805 = vpop.f32.mrb[0].mxu0
        %v806 = vpop.f32.mrb[0].mxu0
        %v807 = vadd.f32 0.0, %v806
        %v808 = vpop.f32.mrb[0].mxu0
        %809 = vdwg.mxu0
        %v830 = vcombine.high %v732, %v732
        %v831 = vcombine.high %v735, %v735
        %v832 = vcombine.high %v740, %v740
        %v833 = vcombine.high %v743, %v743
        %v834 = vcombine.high %v751, %v751
        %v835 = vcombine.high %v756, %v756
        %v836 = vcombine.high %v759, %v759
        %v837 = vcombine.high %v764, %v764
        %v838 = vcombine.high %v772, %v772
        %v839 = vcombine.high %v775, %v775
        %v840 = vcombine.high %v780, %v780
        %v841 = vcombine.high %v783, %v783
        %v842 = vcombine.high %v791, %v791
        %v843 = vcombine.high %v796, %v796
        %v844 = vcombine.high %v799, %v799
        %v845 = vcombine.high %v804, %v804
        %v846 = vcombine.low %v732, %v830
        %v847 = vcombine.low %v735, %v831
        %v848 = vcombine.low %v832, %v743
        %v849 = vcombine.low %v833, %v748
        %v850 = vcombine.low %v751, %v834
        %v851 = vcombine.low %v756, %v835
        %v852 = vcombine.low %v836, %v764
        %v853 = vcombine.low %v837, %v767
        %v854 = vcombine.low %v772, %v838
        %v855 = vcombine.low %v775, %v839
        %v856 = vcombine.low %v840, %v783
        %v857 = vcombine.low %v841, %v788
        %v858 = vcombine.low %v791, %v842
        %v859 = vcombine.low %v796, %v843
        %v860 = vcombine.low %v844, %v804
        %v861 = vcombine.low %v845, %v807
        %v878 = vadd.f32 %v271, %v846
        %v879 = vadd.f32 %v271, %v847
        %v880 = vadd.f32 %v271, %v848
        %v881 = vadd.f32 %v271, %v849
        %v882 = vadd.f32 %v271, %v850
        %v883 = vadd.f32 %v271, %v851
        %v884 = vadd.f32 %v271, %v852
        %v885 = vadd.f32 %v271, %v853
        %v886 = vadd.f32 %v271, %v854
        %v887 = vadd.f32 %v271, %v855
        %v888 = vadd.f32 %v271, %v856
        %v889 = vadd.f32 %v271, %v857
        %v890 = vadd.f32 %v271, %v858
        %v891 = vadd.f32 %v271, %v859
        %v892 = vadd.f32 %v271, %v860
        %v893 = vadd.f32 %v271, %v861
        %s894 = scalar_lea.vmem %s1, 16
        %v895 = vld [vmem:[%s894] sm:$0xf]
        %v896 = vld [vmem:[%s894 + $0x4] sm:$0xf]
        %v897 = vld [vmem:[%s894 + $0x8] sm:$0xf]
        %v898 = vld [vmem:[%s894 + $0xc] sm:$0xf]
        %v903 = vunpack.c.l.b16 %v895
        %v904 = vunpack.c.l.b16 %v896
        %v905 = vunpack.c.l.b16 %v897
        %v906 = vunpack.c.l.b16 %v898
        %v907 = vpack.c.b16 %v904, %v903
        %v908 = vpack.c.b16 %v906, %v905
        %911 = vmatprep.subr.bf16.mxu0 0
        %912 = vmatpush1.bf16.msra.mxu0 %v907
        %913 = vmatprep.subr.bf16.mxu0 0
        %914 = vmatpush1.bf16.msra.mxu0 %v908
        %915 = vmatprep.subr.bf16.mxu0 0
        %916 = vmatpush1.bf16.msra.mxu0 0
        %917 = vmatprep.subr.bf16.mxu0 0
        %918 = vmatpush1.bf16.msra.mxu0 0
        %919 = vmatprep.subr.bf16.mxu0 0
        %920 = vmatpush1.bf16.msra.mxu0 0
        %921 = vmatprep.subr.bf16.mxu0 0
        %922 = vmatpush1.bf16.msra.mxu0 0
        %923 = vmatprep.subr.bf16.mxu0 0
        %924 = vmatpush1.bf16.msra.mxu0 0
        %925 = vmatprep.subr.bf16.mxu0 0
        %926 = vmatpush1.bf16.msra.mxu0 0
        %927 = vmatprep.subr.bf16.mxu0 0
        %928 = vmatpush1.bf16.msra.mxu0 0
        %929 = vmatprep.subr.bf16.mxu0 0
        %930 = vmatpush1.bf16.msra.mxu0 0
        %931 = vmatprep.subr.bf16.mxu0 0
        %932 = vmatpush1.bf16.msra.mxu0 0
        %933 = vmatprep.subr.bf16.mxu0 0
        %934 = vmatpush1.bf16.msra.mxu0 0
        %935 = vmatprep.subr.bf16.mxu0 0
        %936 = vmatpush1.bf16.msra.mxu0 0
        %937 = vmatprep.subr.bf16.mxu0 0
        %938 = vmatpush1.bf16.msra.mxu0 0
        %939 = vmatprep.subr.bf16.mxu0 0
        %940 = vmatpush1.bf16.msra.mxu0 0
        %941 = vmatprep.subr.bf16.mxu0 0
        %942 = vmatpush1.bf16.msra.mxu0 0
        %943 = vmatprep.mubr.bf16.mxu0 0
        %944 = vmatmul.mubr.bf16.gmra.mrb[0].mxu0 %v668
        %v945 = vpop.f32.mrb[0].mxu0
        %v946 = vadd.f32 0.0, %v945
        %v947 = vpop.f32.mrb[0].mxu0
        %v948 = vpop.f32.mrb[0].mxu0
        %v949 = vadd.f32 0.0, %v948
        %v950 = vpop.f32.mrb[0].mxu0
        %951 = vmatprep.mubr.bf16.mxu0 0
        %952 = vmatmul.mubr.bf16.gmra.mrb[0].mxu0 %v671
        %v953 = vpop.f32.mrb[0].mxu0
        %v954 = vadd.f32 0.0, %v953
        %v955 = vpop.f32.mrb[0].mxu0
        %v956 = vpop.f32.mrb[0].mxu0
        %v957 = vadd.f32 0.0, %v956
        %v958 = vpop.f32.mrb[0].mxu0
        %959 = vmatprep.mubr.bf16.mxu0 0
        %960 = vmatmul.mubr.bf16.gmra.mrb[0].mxu0 %v674
        %v961 = vpop.f32.mrb[0].mxu0
        %v962 = vadd.f32 0.0, %v961
        %v963 = vpop.f32.mrb[0].mxu0
        %v964 = vpop.f32.mrb[0].mxu0
        %v965 = vadd.f32 0.0, %v964
        %v966 = vpop.f32.mrb[0].mxu0
        %967 = vmatprep.mubr.bf16.mxu0 0
        %968 = vmatmul.mubr.bf16.gmra.mrb[0].mxu0 %v677
        %v969 = vpop.f32.mrb[0].mxu0
        %v970 = vadd.f32 0.0, %v969
        %v971 = vpop.f32.mrb[0].mxu0
        %v972 = vpop.f32.mrb[0].mxu0
        %v973 = vadd.f32 0.0, %v972
        %v974 = vpop.f32.mrb[0].mxu0
        %975 = vmatprep.mubr.bf16.mxu0 0
        %976 = vmatmul.mubr.bf16.gmra.mrb[0].mxu0 %v680
        %v977 = vpop.f32.mrb[0].mxu0
        %v978 = vadd.f32 0.0, %v977
        %v979 = vpop.f32.mrb[0].mxu0
        %v980 = vpop.f32.mrb[0].mxu0
        %v981 = vadd.f32 0.0, %v980
        %v982 = vpop.f32.mrb[0].mxu0
        %983 = vmatprep.mubr.bf16.mxu0 0
        %984 = vmatmul.mubr.bf16.gmra.mrb[0].mxu0 %v683
        %v985 = vpop.f32.mrb[0].mxu0
        %v986 = vadd.f32 0.0, %v985
        %v987 = vpop.f32.mrb[0].mxu0
        %v988 = vpop.f32.mrb[0].mxu0
        %v989 = vadd.f32 0.0, %v988
        %v990 = vpop.f32.mrb[0].mxu0
        %991 = vmatprep.mubr.bf16.mxu0 0
        %992 = vmatmul.mubr.bf16.gmra.mrb[0].mxu0 %v686
        %v993 = vpop.f32.mrb[0].mxu0
        %v994 = vadd.f32 0.0, %v993
        %v995 = vpop.f32.mrb[0].mxu0
        %v996 = vpop.f32.mrb[0].mxu0
        %v997 = vadd.f32 0.0, %v996
        %v998 = vpop.f32.mrb[0].mxu0
        %999 = vmatprep.mubr.bf16.mxu0 0
        %1000 = vmatmul.mubr.bf16.gmra.mrb[0].mxu0 %v689
        %v1001 = vpop.f32.mrb[0].mxu0
        %v1002 = vadd.f32 0.0, %v1001
        %v1003 = vpop.f32.mrb[0].mxu0
        %v1004 = vpop.f32.mrb[0].mxu0
        %v1005 = vadd.f32 0.0, %v1004
        %v1006 = vpop.f32.mrb[0].mxu0
        %1007 = vmatprep.mubr.bf16.mxu0 0
        %1008 = vmatmul.mubr.bf16.gmra.mrb[0].mxu0 %v692
        %v1009 = vpop.f32.mrb[0].mxu0
        %v1010 = vadd.f32 0.0, %v1009
        %v1011 = vpop.f32.mrb[0].mxu0
        %v1012 = vpop.f32.mrb[0].mxu0
        %v1013 = vadd.f32 0.0, %v1012
        %v1014 = vpop.f32.mrb[0].mxu0
        %1015 = vmatprep.mubr.bf16.mxu0 0
        %1016 = vmatmul.mubr.bf16.gmra.mrb[0].mxu0 %v695
        %v1017 = vpop.f32.mrb[0].mxu0
        %v1018 = vadd.f32 0.0, %v1017
        %v1019 = vpop.f32.mrb[0].mxu0
        %v1020 = vpop.f32.mrb[0].mxu0
        %v1021 = vadd.f32 0.0, %v1020
        %v1022 = vpop.f32.mrb[0].mxu0
        %1023 = vdwg.mxu0
        %v1044 = vcombine.high %v946, %v946
        %v1045 = vcombine.high %v949, %v949
        %v1046 = vcombine.high %v954, %v954
        %v1047 = vcombine.high %v957, %v957
        %v1048 = vcombine.high %v962, %v962
        %v1049 = vcombine.high %v965, %v965
        %v1050 = vcombine.high %v970, %v970
        %v1051 = vcombine.high %v973, %v973
        %v1052 = vcombine.high %v978, %v978
        %v1053 = vcombine.high %v981, %v981
        %v1054 = vcombine.high %v986, %v986
        %v1055 = vcombine.high %v989, %v989
        %v1056 = vcombine.high %v994, %v994
        %v1057 = vcombine.high %v997, %v997
        %v1058 = vcombine.high %v1002, %v1002
        %v1059 = vcombine.high %v1005, %v1005
        %v1060 = vcombine.high %v1010, %v1010
        %v1061 = vcombine.high %v1013, %v1013
        %v1062 = vcombine.high %v1018, %v1018
        %v1063 = vcombine.high %v1021, %v1021
        %v1064 = vcombine.low %v946, %v1044
        %v1065 = vcombine.low %v949, %v1045
        %v1066 = vcombine.low %v1046, %v957
        %v1067 = vcombine.low %v1047, %v962
        %v1068 = vcombine.low %v965, %v1049
        %v1069 = vcombine.low %v970, %v1050
        %v1070 = vcombine.low %v1051, %v978
        %v1071 = vcombine.low %v1052, %v981
        %v1072 = vcombine.low %v986, %v1054
        %v1073 = vcombine.low %v989, %v1055
        %v1074 = vcombine.low %v1056, %v997
        %v1075 = vcombine.low %v1057, %v1002
        %v1076 = vcombine.low %v1005, %v1059
        %v1077 = vcombine.low %v1010, %v1060
        %v1078 = vcombine.low %v1061, %v1018
        %v1079 = vcombine.low %v1062, %v1021
        %vm1080 = vcmask 1046528
        %v1081 = vrot.slane %v1064, 1
        %v1082 = vrot.slane %v1065, 1
        %v1083 = vsel %vm1080, %v1081, %v1082
        %v1084 = vrot.slane %v954, 1
        %v1085 = vsel %vm1080, %v1082, %v1084
        %v1086 = vrot.slane %v1066, 1
        %v1087 = vrot.slane %v1067, 1
        %v1088 = vsel %vm1080, %v1086, %v1087
        %v1089 = vrot.slane %v1048, 1
        %v1090 = vsel %vm1080, %v1087, %v1089
        %v1091 = vrot.slane %v1068, 1
        %v1092 = vrot.slane %v1069, 1
        %v1093 = vsel %vm1080, %v1091, %v1092
        %v1094 = vrot.slane %v973, 1
        %v1095 = vsel %vm1080, %v1092, %v1094
        %v1096 = vrot.slane %v1070, 1
        %v1097 = vrot.slane %v1071, 1
        %v1098 = vsel %vm1080, %v1096, %v1097
        %v1099 = vrot.slane %v1053, 1
        %v1100 = vsel %vm1080, %v1097, %v1099
        %v1101 = vrot.slane %v1072, 1
        %v1102 = vrot.slane %v1073, 1
        %v1103 = vsel %vm1080, %v1101, %v1102
        %v1104 = vrot.slane %v994, 1
        %v1105 = vsel %vm1080, %v1102, %v1104
        %v1106 = vrot.slane %v1074, 1
        %v1107 = vrot.slane %v1075, 1
        %v1108 = vsel %vm1080, %v1106, %v1107
        %v1109 = vrot.slane %v1058, 1
        %v1110 = vsel %vm1080, %v1107, %v1109
        %v1111 = vrot.slane %v1076, 1
        %v1112 = vrot.slane %v1077, 1
        %v1113 = vsel %vm1080, %v1111, %v1112
        %v1114 = vrot.slane %v1013, 1
        %v1115 = vsel %vm1080, %v1112, %v1114
        %v1116 = vrot.slane %v1078, 1
        %v1117 = vrot.slane %v1079, 1
        %v1118 = vsel %vm1080, %v1116, %v1117
        %v1119 = vrot.slane %v1063, 1
        %v1120 = vsel %vm1080, %v1117, %v1119
        %v1137 = vadd.f32 %v878, %v1083
        %v1138 = vadd.f32 %v879, %v1085
        %v1139 = vadd.f32 %v880, %v1088
        %v1140 = vadd.f32 %v881, %v1090
        %v1141 = vadd.f32 %v882, %v1093
        %v1142 = vadd.f32 %v883, %v1095
        %v1143 = vadd.f32 %v884, %v1098
        %v1144 = vadd.f32 %v885, %v1100
        %v1145 = vadd.f32 %v886, %v1103
        %v1146 = vadd.f32 %v887, %v1105
        %v1147 = vadd.f32 %v888, %v1108
        %v1148 = vadd.f32 %v889, %v1110
        %v1149 = vadd.f32 %v890, %v1113
        %v1150 = vadd.f32 %v891, %v1115
        %v1151 = vadd.f32 %v892, %v1118
        %v1152 = vadd.f32 %v893, %v1120
        %s1153 = scalar_lea.vmem %s1, 32
        %v1154 = vld [vmem:[%s1153] sm:$0xf]
        %v1155 = vld [vmem:[%s1153 + $0x4] sm:$0xf]
        %v1156 = vld [vmem:[%s1153 + $0x8] sm:$0xf]
        %v1157 = vld [vmem:[%s1153 + $0xc] sm:$0xf]
        %v1162 = vunpack.c.l.b16 %v1154
        %v1163 = vunpack.c.l.b16 %v1155
        %v1164 = vunpack.c.l.b16 %v1156
        %v1165 = vunpack.c.l.b16 %v1157
        %v1166 = vpack.c.b16 %v1163, %v1162
        %v1167 = vpack.c.b16 %v1165, %v1164
        %1170 = vmatprep.subr.bf16.mxu0 0
        %1171 = vmatpush1.bf16.msra.mxu0 %v1166
        %1172 = vmatprep.subr.bf16.mxu0 0
        %1173 = vmatpush1.bf16.msra.mxu0 %v1167
        %1174 = vmatprep.subr.bf16.mxu0 0
        %1175 = vmatpush1.bf16.msra.mxu0 0
        %1176 = vmatprep.subr.bf16.mxu0 0
        %1177 = vmatpush1.bf16.msra.mxu0 0
        %1178 = vmatprep.subr.bf16.mxu0 0
        %1179 = vmatpush1.bf16.msra.mxu0 0
        %1180 = vmatprep.subr.bf16.mxu0 0
        %1181 = vmatpush1.bf16.msra.mxu0 0
        %1182 = vmatprep.subr.bf16.mxu0 0
        %1183 = vmatpush1.bf16.msra.mxu0 0
        %1184 = vmatprep.subr.bf16.mxu0 0
        %1185 = vmatpush1.bf16.msra.mxu0 0
        %1186 = vmatprep.subr.bf16.mxu0 0
        %1187 = vmatpush1.bf16.msra.mxu0 0
        %1188 = vmatprep.subr.bf16.mxu0 0
        %1189 = vmatpush1.bf16.msra.mxu0 0
        %1190 = vmatprep.subr.bf16.mxu0 0
        %1191 = vmatpush1.bf16.msra.mxu0 0
        %1192 = vmatprep.subr.bf16.mxu0 0
        %1193 = vmatpush1.bf16.msra.mxu0 0
        %1194 = vmatprep.subr.bf16.mxu0 0
        %1195 = vmatpush1.bf16.msra.mxu0 0
        %1196 = vmatprep.subr.bf16.mxu0 0
        %1197 = vmatpush1.bf16.msra.mxu0 0
        %1198 = vmatprep.subr.bf16.mxu0 0
        %1199 = vmatpush1.bf16.msra.mxu0 0
        %1200 = vmatprep.subr.bf16.mxu0 0
        %1201 = vmatpush1.bf16.msra.mxu0 0
        %1202 = vmatprep.mubr.bf16.mxu0 0
        %1203 = vmatmul.mubr.bf16.gmra.mrb[0].mxu0 %v668
        %v1204 = vpop.f32.mrb[0].mxu0
        %v1205 = vadd.f32 0.0, %v1204
        %v1206 = vpop.f32.mrb[0].mxu0
        %v1207 = vpop.f32.mrb[0].mxu0
        %v1208 = vadd.f32 0.0, %v1207
        %v1209 = vpop.f32.mrb[0].mxu0
        %1210 = vmatprep.mubr.bf16.mxu0 0
        %1211 = vmatmul.mubr.bf16.gmra.mrb[0].mxu0 %v671
        %v1212 = vpop.f32.mrb[0].mxu0
        %v1213 = vadd.f32 0.0, %v1212
        %v1214 = vpop.f32.mrb[0].mxu0
        %v1215 = vpop.f32.mrb[0].mxu0
        %v1216 = vadd.f32 0.0, %v1215
        %v1217 = vpop.f32.mrb[0].mxu0
        %1218 = vmatprep.mubr.bf16.mxu0 0
        %1219 = vmatmul.mubr.bf16.gmra.mrb[0].mxu0 %v674
        %v1220 = vpop.f32.mrb[0].mxu0
        %v1221 = vadd.f32 0.0, %v1220
        %v1222 = vpop.f32.mrb[0].mxu0
        %v1223 = vpop.f32.mrb[0].mxu0
        %v1224 = vadd.f32 0.0, %v1223
        %v1225 = vpop.f32.mrb[0].mxu0
        %1226 = vmatprep.mubr.bf16.mxu0 0
        %1227 = vmatmul.mubr.bf16.gmra.mrb[0].mxu0 %v677
        %v1228 = vpop.f32.mrb[0].mxu0
        %v1229 = vadd.f32 0.0, %v1228
        %v1230 = vpop.f32.mrb[0].mxu0
        %v1231 = vpop.f32.mrb[0].mxu0
        %v1232 = vadd.f32 0.0, %v1231
        %v1233 = vpop.f32.mrb[0].mxu0
        %1234 = vmatprep.mubr.bf16.mxu0 0
        %1235 = vmatmul.mubr.bf16.gmra.mrb[0].mxu0 %v680
        %v1236 = vpop.f32.mrb[0].mxu0
        %v1237 = vadd.f32 0.0, %v1236
        %v1238 = vpop.f32.mrb[0].mxu0
        %v1239 = vpop.f32.mrb[0].mxu0
        %v1240 = vadd.f32 0.0, %v1239
        %v1241 = vpop.f32.mrb[0].mxu0
        %1242 = vmatprep.mubr.bf16.mxu0 0
        %1243 = vmatmul.mubr.bf16.gmra.mrb[0].mxu0 %v683
        %v1244 = vpop.f32.mrb[0].mxu0
        %v1245 = vadd.f32 0.0, %v1244
        %v1246 = vpop.f32.mrb[0].mxu0
        %v1247 = vpop.f32.mrb[0].mxu0
        %v1248 = vadd.f32 0.0, %v1247
        %v1249 = vpop.f32.mrb[0].mxu0
        %1250 = vmatprep.mubr.bf16.mxu0 0
        %1251 = vmatmul.mubr.bf16.gmra.mrb[0].mxu0 %v686
        %v1252 = vpop.f32.mrb[0].mxu0
        %v1253 = vadd.f32 0.0, %v1252
        %v1254 = vpop.f32.mrb[0].mxu0
        %v1255 = vpop.f32.mrb[0].mxu0
        %v1256 = vadd.f32 0.0, %v1255
        %v1257 = vpop.f32.mrb[0].mxu0
        %1258 = vmatprep.mubr.bf16.mxu0 0
        %1259 = vmatmul.mubr.bf16.gmra.mrb[0].mxu0 %v689
        %v1260 = vpop.f32.mrb[0].mxu0
        %v1261 = vadd.f32 0.0, %v1260
        %v1262 = vpop.f32.mrb[0].mxu0
        %v1263 = vpop.f32.mrb[0].mxu0
        %v1264 = vadd.f32 0.0, %v1263
        %v1265 = vpop.f32.mrb[0].mxu0
        %1266 = vmatprep.mubr.bf16.mxu0 0
        %1267 = vmatmul.mubr.bf16.gmra.mrb[0].mxu0 %v692
        %v1268 = vpop.f32.mrb[0].mxu0
        %v1269 = vadd.f32 0.0, %v1268
        %v1270 = vpop.f32.mrb[0].mxu0
        %v1271 = vpop.f32.mrb[0].mxu0
        %v1272 = vadd.f32 0.0, %v1271
        %v1273 = vpop.f32.mrb[0].mxu0
        %1274 = vmatprep.mubr.bf16.mxu0 0
        %1275 = vmatmul.mubr.bf16.gmra.mrb[0].mxu0 %v695
        %v1276 = vpop.f32.mrb[0].mxu0
        %v1277 = vadd.f32 0.0, %v1276
        %v1278 = vpop.f32.mrb[0].mxu0
        %v1279 = vpop.f32.mrb[0].mxu0
        %v1280 = vadd.f32 0.0, %v1279
        %v1281 = vpop.f32.mrb[0].mxu0
        %1282 = vdwg.mxu0
        %v1303 = vcombine.high %v1205, %v1205
        %v1304 = vcombine.high %v1208, %v1208
        %v1305 = vcombine.high %v1213, %v1213
        %v1306 = vcombine.high %v1216, %v1216
        %v1307 = vcombine.high %v1221, %v1221
        %v1308 = vcombine.high %v1224, %v1224
        %v1309 = vcombine.high %v1229, %v1229
        %v1310 = vcombine.high %v1232, %v1232
        %v1311 = vcombine.high %v1237, %v1237
        %v1312 = vcombine.high %v1240, %v1240
        %v1313 = vcombine.high %v1245, %v1245
        %v1314 = vcombine.high %v1248, %v1248
        %v1315 = vcombine.high %v1253, %v1253
        %v1316 = vcombine.high %v1256, %v1256
        %v1317 = vcombine.high %v1261, %v1261
        %v1318 = vcombine.high %v1264, %v1264
        %v1319 = vcombine.high %v1269, %v1269
        %v1320 = vcombine.high %v1272, %v1272
        %v1321 = vcombine.high %v1277, %v1277
        %v1322 = vcombine.high %v1280, %v1280
        %v1323 = vcombine.low %v1205, %v1303
        %v1324 = vcombine.low %v1208, %v1304
        %v1325 = vcombine.low %v1305, %v1216
        %v1326 = vcombine.low %v1306, %v1221
        %v1327 = vcombine.low %v1224, %v1308
        %v1328 = vcombine.low %v1229, %v1309
        %v1329 = vcombine.low %v1310, %v1237
        %v1330 = vcombine.low %v1311, %v1240
        %v1331 = vcombine.low %v1245, %v1313
        %v1332 = vcombine.low %v1248, %v1314
        %v1333 = vcombine.low %v1315, %v1256
        %v1334 = vcombine.low %v1316, %v1261
        %v1335 = vcombine.low %v1264, %v1318
        %v1336 = vcombine.low %v1269, %v1319
        %v1337 = vcombine.low %v1320, %v1277
        %v1338 = vcombine.low %v1321, %v1280
        %vm1339 = vcmask 1045504
        %v1340 = vrot.slane %v1323, 2
        %v1341 = vrot.slane %v1324, 2
        %v1342 = vsel %vm1339, %v1340, %v1341
        %v1343 = vrot.slane %v1213, 2
        %v1344 = vsel %vm1339, %v1341, %v1343
        %v1345 = vrot.slane %v1325, 2
        %v1346 = vrot.slane %v1326, 2
        %v1347 = vsel %vm1339, %v1345, %v1346
        %v1348 = vrot.slane %v1307, 2
        %v1349 = vsel %vm1339, %v1346, %v1348
        %v1350 = vrot.slane %v1327, 2
        %v1351 = vrot.slane %v1328, 2
        %v1352 = vsel %vm1339, %v1350, %v1351
        %v1353 = vrot.slane %v1232, 2
        %v1354 = vsel %vm1339, %v1351, %v1353
        %v1355 = vrot.slane %v1329, 2
        %v1356 = vrot.slane %v1330, 2
        %v1357 = vsel %vm1339, %v1355, %v1356
        %v1358 = vrot.slane %v1312, 2
        %v1359 = vsel %vm1339, %v1356, %v1358
        %v1360 = vrot.slane %v1331, 2
        %v1361 = vrot.slane %v1332, 2
        %v1362 = vsel %vm1339, %v1360, %v1361
        %v1363 = vrot.slane %v1253, 2
        %v1364 = vsel %vm1339, %v1361, %v1363
        %v1365 = vrot.slane %v1333, 2
        %v1366 = vrot.slane %v1334, 2
        %v1367 = vsel %vm1339, %v1365, %v1366
        %v1368 = vrot.slane %v1317, 2
        %v1369 = vsel %vm1339, %v1366, %v1368
        %v1370 = vrot.slane %v1335, 2
        %v1371 = vrot.slane %v1336, 2
        %v1372 = vsel %vm1339, %v1370, %v1371
        %v1373 = vrot.slane %v1272, 2
        %v1374 = vsel %vm1339, %v1371, %v1373
        %v1375 = vrot.slane %v1337, 2
        %v1376 = vrot.slane %v1338, 2
        %v1377 = vsel %vm1339, %v1375, %v1376
        %v1378 = vrot.slane %v1322, 2
        %v1379 = vsel %vm1339, %v1376, %v1378
        %v1396 = vadd.f32 %v1137, %v1342
        %v1397 = vadd.f32 %v1138, %v1344
        %v1398 = vadd.f32 %v1139, %v1347
        %v1399 = vadd.f32 %v1140, %v1349
        %v1400 = vadd.f32 %v1141, %v1352
        %v1401 = vadd.f32 %v1142, %v1354
        %v1402 = vadd.f32 %v1143, %v1357
        %v1403 = vadd.f32 %v1144, %v1359
        %v1404 = vadd.f32 %v1145, %v1362
        %v1405 = vadd.f32 %v1146, %v1364
        %v1406 = vadd.f32 %v1147, %v1367
        %v1407 = vadd.f32 %v1148, %v1369
        %v1408 = vadd.f32 %v1149, %v1372
        %v1409 = vadd.f32 %v1150, %v1374
        %v1410 = vadd.f32 %v1151, %v1377
        %v1411 = vadd.f32 %v1152, %v1379
        %s1412 = scalar_lea.vmem %s1, 48
        %v1413 = vld [vmem:[%s1412] sm:$0xf]
        %v1414 = vld [vmem:[%s1412 + $0x4] sm:$0xf]
        %v1415 = vld [vmem:[%s1412 + $0x8] sm:$0xf]
        %v1416 = vld [vmem:[%s1412 + $0xc] sm:$0xf]
        %v1421 = vunpack.c.l.b16 %v1413
        %v1422 = vunpack.c.l.b16 %v1414
        %v1423 = vunpack.c.l.b16 %v1415
        %v1424 = vunpack.c.l.b16 %v1416
        %v1425 = vpack.c.b16 %v1422, %v1421
        %v1426 = vpack.c.b16 %v1424, %v1423
        %1429 = vmatprep.subr.bf16.mxu0 0
        %1430 = vmatpush1.bf16.msra.mxu0 %v1425
        %1431 = vmatprep.subr.bf16.mxu0 0
        %1432 = vmatpush1.bf16.msra.mxu0 %v1426
        %1433 = vmatprep.subr.bf16.mxu0 0
        %1434 = vmatpush1.bf16.msra.mxu0 0
        %1435 = vmatprep.subr.bf16.mxu0 0
        %1436 = vmatpush1.bf16.msra.mxu0 0
        %1437 = vmatprep.subr.bf16.mxu0 0
        %1438 = vmatpush1.bf16.msra.mxu0 0
        %1439 = vmatprep.subr.bf16.mxu0 0
        %1440 = vmatpush1.bf16.msra.mxu0 0
        %1441 = vmatprep.subr.bf16.mxu0 0
        %1442 = vmatpush1.bf16.msra.mxu0 0
        %1443 = vmatprep.subr.bf16.mxu0 0
        %1444 = vmatpush1.bf16.msra.mxu0 0
        %1445 = vmatprep.subr.bf16.mxu0 0
        %1446 = vmatpush1.bf16.msra.mxu0 0
        %1447 = vmatprep.subr.bf16.mxu0 0
        %1448 = vmatpush1.bf16.msra.mxu0 0
        %1449 = vmatprep.subr.bf16.mxu0 0
        %1450 = vmatpush1.bf16.msra.mxu0 0
        %1451 = vmatprep.subr.bf16.mxu0 0
        %1452 = vmatpush1.bf16.msra.mxu0 0
        %1453 = vmatprep.subr.bf16.mxu0 0
        %1454 = vmatpush1.bf16.msra.mxu0 0
        %1455 = vmatprep.subr.bf16.mxu0 0
        %1456 = vmatpush1.bf16.msra.mxu0 0
        %1457 = vmatprep.subr.bf16.mxu0 0
        %1458 = vmatpush1.bf16.msra.mxu0 0
        %1459 = vmatprep.subr.bf16.mxu0 0
        %1460 = vmatpush1.bf16.msra.mxu0 0
        %1461 = vmatprep.mubr.bf16.mxu0 0
        %1462 = vmatmul.mubr.bf16.gmra.mrb[0].mxu0 %v668
        %v1463 = vpop.f32.mrb[0].mxu0
        %v1464 = vadd.f32 0.0, %v1463
        %v1465 = vpop.f32.mrb[0].mxu0
        %v1466 = vpop.f32.mrb[0].mxu0
        %v1467 = vadd.f32 0.0, %v1466
        %v1468 = vpop.f32.mrb[0].mxu0
        %1469 = vmatprep.mubr.bf16.mxu0 0
        %1470 = vmatmul.mubr.bf16.gmra.mrb[0].mxu0 %v671
        %v1471 = vpop.f32.mrb[0].mxu0
        %v1472 = vadd.f32 0.0, %v1471
        %v1473 = vpop.f32.mrb[0].mxu0
        %v1474 = vpop.f32.mrb[0].mxu0
        %v1475 = vadd.f32 0.0, %v1474
        %v1476 = vpop.f32.mrb[0].mxu0
        %1477 = vmatprep.mubr.bf16.mxu0 0
        %1478 = vmatmul.mubr.bf16.gmra.mrb[0].mxu0 %v674
        %v1479 = vpop.f32.mrb[0].mxu0
        %v1480 = vadd.f32 0.0, %v1479
        %v1481 = vpop.f32.mrb[0].mxu0
        %v1482 = vpop.f32.mrb[0].mxu0
        %v1483 = vadd.f32 0.0, %v1482
        %v1484 = vpop.f32.mrb[0].mxu0
        %1485 = vmatprep.mubr.bf16.mxu0 0
        %1486 = vmatmul.mubr.bf16.gmra.mrb[0].mxu0 %v677
        %v1487 = vpop.f32.mrb[0].mxu0
        %v1488 = vadd.f32 0.0, %v1487
        %v1489 = vpop.f32.mrb[0].mxu0
        %v1490 = vpop.f32.mrb[0].mxu0
        %v1491 = vadd.f32 0.0, %v1490
        %v1492 = vpop.f32.mrb[0].mxu0
        %1493 = vmatprep.mubr.bf16.mxu0 0
        %1494 = vmatmul.mubr.bf16.gmra.mrb[0].mxu0 %v680
        %v1495 = vpop.f32.mrb[0].mxu0
        %v1496 = vadd.f32 0.0, %v1495
        %v1497 = vpop.f32.mrb[0].mxu0
        %v1498 = vpop.f32.mrb[0].mxu0
        %v1499 = vadd.f32 0.0, %v1498
        %v1500 = vpop.f32.mrb[0].mxu0
        %1501 = vmatprep.mubr.bf16.mxu0 0
        %1502 = vmatmul.mubr.bf16.gmra.mrb[0].mxu0 %v683
        %v1503 = vpop.f32.mrb[0].mxu0
        %v1504 = vadd.f32 0.0, %v1503
        %v1505 = vpop.f32.mrb[0].mxu0
        %v1506 = vpop.f32.mrb[0].mxu0
        %v1507 = vadd.f32 0.0, %v1506
        %v1508 = vpop.f32.mrb[0].mxu0
        %1509 = vmatprep.mubr.bf16.mxu0 0
        %1510 = vmatmul.mubr.bf16.gmra.mrb[0].mxu0 %v686
        %v1511 = vpop.f32.mrb[0].mxu0
        %v1512 = vadd.f32 0.0, %v1511
        %v1513 = vpop.f32.mrb[0].mxu0
        %v1514 = vpop.f32.mrb[0].mxu0
        %v1515 = vadd.f32 0.0, %v1514
        %v1516 = vpop.f32.mrb[0].mxu0
        %1517 = vmatprep.mubr.bf16.mxu0 0
        %1518 = vmatmul.mubr.bf16.gmra.mrb[0].mxu0 %v689
        %v1519 = vpop.f32.mrb[0].mxu0
        %v1520 = vadd.f32 0.0, %v1519
        %v1521 = vpop.f32.mrb[0].mxu0
        %v1522 = vpop.f32.mrb[0].mxu0
        %v1523 = vadd.f32 0.0, %v1522
        %v1524 = vpop.f32.mrb[0].mxu0
        %1525 = vmatprep.mubr.bf16.mxu0 0
        %1526 = vmatmul.mubr.bf16.gmra.mrb[0].mxu0 %v692
        %v1527 = vpop.f32.mrb[0].mxu0
        %v1528 = vadd.f32 0.0, %v1527
        %v1529 = vpop.f32.mrb[0].mxu0
        %v1530 = vpop.f32.mrb[0].mxu0
        %v1531 = vadd.f32 0.0, %v1530
        %v1532 = vpop.f32.mrb[0].mxu0
        %1533 = vmatprep.mubr.bf16.mxu0 0
        %1534 = vmatmul.mubr.bf16.gmra.mrb[0].mxu0 %v695
        %v1535 = vpop.f32.mrb[0].mxu0
        %v1536 = vadd.f32 0.0, %v1535
        %v1537 = vpop.f32.mrb[0].mxu0
        %v1538 = vpop.f32.mrb[0].mxu0
        %v1539 = vadd.f32 0.0, %v1538
        %v1540 = vpop.f32.mrb[0].mxu0
        %1541 = vdwg.mxu0
        %v1562 = vcombine.high %v1464, %v1464
        %v1563 = vcombine.high %v1467, %v1467
        %v1564 = vcombine.high %v1472, %v1472
        %v1565 = vcombine.high %v1475, %v1475
        %v1566 = vcombine.high %v1480, %v1480
        %v1567 = vcombine.high %v1483, %v1483
        %v1568 = vcombine.high %v1488, %v1488
        %v1569 = vcombine.high %v1491, %v1491
        %v1570 = vcombine.high %v1496, %v1496
        %v1571 = vcombine.high %v1499, %v1499
        %v1572 = vcombine.high %v1504, %v1504
        %v1573 = vcombine.high %v1507, %v1507
        %v1574 = vcombine.high %v1512, %v1512
        %v1575 = vcombine.high %v1515, %v1515
        %v1576 = vcombine.high %v1520, %v1520
        %v1577 = vcombine.high %v1523, %v1523
        %v1578 = vcombine.high %v1528, %v1528
        %v1579 = vcombine.high %v1531, %v1531
        %v1580 = vcombine.high %v1536, %v1536
        %v1581 = vcombine.high %v1539, %v1539
        %v1582 = vcombine.low %v1464, %v1562
        %v1583 = vcombine.low %v1467, %v1563
        %v1584 = vcombine.low %v1564, %v1475
        %v1585 = vcombine.low %v1565, %v1480
        %v1586 = vcombine.low %v1483, %v1567
        %v1587 = vcombine.low %v1488, %v1568
        %v1588 = vcombine.low %v1569, %v1496
        %v1589 = vcombine.low %v1570, %v1499
        %v1590 = vcombine.low %v1504, %v1572
        %v1591 = vcombine.low %v1507, %v1573
        %v1592 = vcombine.low %v1574, %v1515
        %v1593 = vcombine.low %v1575, %v1520
        %v1594 = vcombine.low %v1523, %v1577
        %v1595 = vcombine.low %v1528, %v1578
        %v1596 = vcombine.low %v1579, %v1536
        %v1597 = vcombine.low %v1580, %v1539
        %vm1598 = vcmask 1044480
        %v1599 = vrot.slane %v1582, 3
        %v1600 = vrot.slane %v1583, 3
        %v1601 = vsel %vm1598, %v1599, %v1600
        %v1602 = vrot.slane %v1472, 3
        %v1603 = vsel %vm1598, %v1600, %v1602
        %v1604 = vrot.slane %v1584, 3
        %v1605 = vrot.slane %v1585, 3
        %v1606 = vsel %vm1598, %v1604, %v1605
        %v1607 = vrot.slane %v1566, 3
        %v1608 = vsel %vm1598, %v1605, %v1607
        %v1609 = vrot.slane %v1586, 3
        %v1610 = vrot.slane %v1587, 3
        %v1611 = vsel %vm1598, %v1609, %v1610
        %v1612 = vrot.slane %v1491, 3
        %v1613 = vsel %vm1598, %v1610, %v1612
        %v1614 = vrot.slane %v1588, 3
        %v1615 = vrot.slane %v1589, 3
        %v1616 = vsel %vm1598, %v1614, %v1615
        %v1617 = vrot.slane %v1571, 3
        %v1618 = vsel %vm1598, %v1615, %v1617
        %v1619 = vrot.slane %v1590, 3
        %v1620 = vrot.slane %v1591, 3
        %v1621 = vsel %vm1598, %v1619, %v1620
        %v1622 = vrot.slane %v1512, 3
        %v1623 = vsel %vm1598, %v1620, %v1622
        %v1624 = vrot.slane %v1592, 3
        %v1625 = vrot.slane %v1593, 3
        %v1626 = vsel %vm1598, %v1624, %v1625
        %v1627 = vrot.slane %v1576, 3
        %v1628 = vsel %vm1598, %v1625, %v1627
        %v1629 = vrot.slane %v1594, 3
        %v1630 = vrot.slane %v1595, 3
        %v1631 = vsel %vm1598, %v1629, %v1630
        %v1632 = vrot.slane %v1531, 3
        %v1633 = vsel %vm1598, %v1630, %v1632
        %v1634 = vrot.slane %v1596, 3
        %v1635 = vrot.slane %v1597, 3
        %v1636 = vsel %vm1598, %v1634, %v1635
        %v1637 = vrot.slane %v1581, 3
        %v1638 = vsel %vm1598, %v1635, %v1637
        %v1655 = vadd.f32 %v1396, %v1601
        %v1656 = vadd.f32 %v1397, %v1603
        %v1657 = vadd.f32 %v1398, %v1606
        %v1658 = vadd.f32 %v1399, %v1608
        %v1659 = vadd.f32 %v1400, %v1611
        %v1660 = vadd.f32 %v1401, %v1613
        %v1661 = vadd.f32 %v1402, %v1616
        %v1662 = vadd.f32 %v1403, %v1618
        %v1663 = vadd.f32 %v1404, %v1621
        %v1664 = vadd.f32 %v1405, %v1623
        %v1665 = vadd.f32 %v1406, %v1626
        %v1666 = vadd.f32 %v1407, %v1628
        %v1667 = vadd.f32 %v1408, %v1631
        %v1668 = vadd.f32 %v1409, %v1633
        %v1669 = vadd.f32 %v1410, %v1636
        %v1670 = vadd.f32 %v1411, %v1638
        %s1671 = scalar_lea.vmem %s1, 64
        %v1672 = vld [vmem:[%s1671] sm:$0xf]
        %v1673 = vld [vmem:[%s1671 + $0x4] sm:$0xf]
        %v1674 = vld [vmem:[%s1671 + $0x8] sm:$0xf]
        %v1675 = vld [vmem:[%s1671 + $0xc] sm:$0xf]
        %v1680 = vunpack.c.l.b16 %v1672
        %v1681 = vunpack.c.l.b16 %v1673
        %v1682 = vunpack.c.l.b16 %v1674
        %v1683 = vunpack.c.l.b16 %v1675
        %v1684 = vpack.c.b16 %v1681, %v1680
        %v1685 = vpack.c.b16 %v1683, %v1682
        %1688 = vmatprep.subr.bf16.mxu0 0
        %1689 = vmatpush1.bf16.msra.mxu0 %v1684
        %1690 = vmatprep.subr.bf16.mxu0 0
        %1691 = vmatpush1.bf16.msra.mxu0 %v1685
        %1692 = vmatprep.subr.bf16.mxu0 0
        %1693 = vmatpush1.bf16.msra.mxu0 0
        %1694 = vmatprep.subr.bf16.mxu0 0
        %1695 = vmatpush1.bf16.msra.mxu0 0
        %1696 = vmatprep.subr.bf16.mxu0 0
        %1697 = vmatpush1.bf16.msra.mxu0 0
        %1698 = vmatprep.subr.bf16.mxu0 0
        %1699 = vmatpush1.bf16.msra.mxu0 0
        %1700 = vmatprep.subr.bf16.mxu0 0
        %1701 = vmatpush1.bf16.msra.mxu0 0
        %1702 = vmatprep.subr.bf16.mxu0 0
        %1703 = vmatpush1.bf16.msra.mxu0 0
        %1704 = vmatprep.subr.bf16.mxu0 0
        %1705 = vmatpush1.bf16.msra.mxu0 0
        %1706 = vmatprep.subr.bf16.mxu0 0
        %1707 = vmatpush1.bf16.msra.mxu0 0
        %1708 = vmatprep.subr.bf16.mxu0 0
        %1709 = vmatpush1.bf16.msra.mxu0 0
        %1710 = vmatprep.subr.bf16.mxu0 0
        %1711 = vmatpush1.bf16.msra.mxu0 0
        %1712 = vmatprep.subr.bf16.mxu0 0
        %1713 = vmatpush1.bf16.msra.mxu0 0
        %1714 = vmatprep.subr.bf16.mxu0 0
        %1715 = vmatpush1.bf16.msra.mxu0 0
        %1716 = vmatprep.subr.bf16.mxu0 0
        %1717 = vmatpush1.bf16.msra.mxu0 0
        %1718 = vmatprep.subr.bf16.mxu0 0
        %1719 = vmatpush1.bf16.msra.mxu0 0
        %1720 = vmatprep.mubr.bf16.mxu0 0
        %1721 = vmatmul.mubr.bf16.gmra.mrb[0].mxu0 %v668
        %v1722 = vpop.f32.mrb[0].mxu0
        %v1723 = vadd.f32 0.0, %v1722
        %v1724 = vpop.f32.mrb[0].mxu0
        %v1725 = vpop.f32.mrb[0].mxu0
        %v1726 = vadd.f32 0.0, %v1725
        %v1727 = vpop.f32.mrb[0].mxu0
        %1728 = vmatprep.mubr.bf16.mxu0 0
        %1729 = vmatmul.mubr.bf16.gmra.mrb[0].mxu0 %v671
        %v1730 = vpop.f32.mrb[0].mxu0
        %v1731 = vadd.f32 0.0, %v1730
        %v1732 = vpop.f32.mrb[0].mxu0
        %v1733 = vpop.f32.mrb[0].mxu0
        %v1734 = vadd.f32 0.0, %v1733
        %v1735 = vpop.f32.mrb[0].mxu0
        %1736 = vmatprep.mubr.bf16.mxu0 0
        %1737 = vmatmul.mubr.bf16.gmra.mrb[0].mxu0 %v674
        %v1738 = vpop.f32.mrb[0].mxu0
        %v1739 = vadd.f32 0.0, %v1738
        %v1740 = vpop.f32.mrb[0].mxu0
        %v1741 = vpop.f32.mrb[0].mxu0
        %v1742 = vadd.f32 0.0, %v1741
        %v1743 = vpop.f32.mrb[0].mxu0
        %1744 = vmatprep.mubr.bf16.mxu0 0
        %1745 = vmatmul.mubr.bf16.gmra.mrb[0].mxu0 %v677
        %v1746 = vpop.f32.mrb[0].mxu0
        %v1747 = vadd.f32 0.0, %v1746
        %v1748 = vpop.f32.mrb[0].mxu0
        %v1749 = vpop.f32.mrb[0].mxu0
        %v1750 = vadd.f32 0.0, %v1749
        %v1751 = vpop.f32.mrb[0].mxu0
        %1752 = vmatprep.mubr.bf16.mxu0 0
        %1753 = vmatmul.mubr.bf16.gmra.mrb[0].mxu0 %v680
        %v1754 = vpop.f32.mrb[0].mxu0
        %v1755 = vadd.f32 0.0, %v1754
        %v1756 = vpop.f32.mrb[0].mxu0
        %v1757 = vpop.f32.mrb[0].mxu0
        %v1758 = vadd.f32 0.0, %v1757
        %v1759 = vpop.f32.mrb[0].mxu0
        %1760 = vmatprep.mubr.bf16.mxu0 0
        %1761 = vmatmul.mubr.bf16.gmra.mrb[0].mxu0 %v683
        %v1762 = vpop.f32.mrb[0].mxu0
        %v1763 = vadd.f32 0.0, %v1762
        %v1764 = vpop.f32.mrb[0].mxu0
        %v1765 = vpop.f32.mrb[0].mxu0
        %v1766 = vadd.f32 0.0, %v1765
        %v1767 = vpop.f32.mrb[0].mxu0
        %1768 = vmatprep.mubr.bf16.mxu0 0
        %1769 = vmatmul.mubr.bf16.gmra.mrb[0].mxu0 %v686
        %v1770 = vpop.f32.mrb[0].mxu0
        %v1771 = vadd.f32 0.0, %v1770
        %v1772 = vpop.f32.mrb[0].mxu0
        %v1773 = vpop.f32.mrb[0].mxu0
        %v1774 = vadd.f32 0.0, %v1773
        %v1775 = vpop.f32.mrb[0].mxu0
        %1776 = vmatprep.mubr.bf16.mxu0 0
        %1777 = vmatmul.mubr.bf16.gmra.mrb[0].mxu0 %v689
        %v1778 = vpop.f32.mrb[0].mxu0
        %v1779 = vadd.f32 0.0, %v1778
        %v1780 = vpop.f32.mrb[0].mxu0
        %v1781 = vpop.f32.mrb[0].mxu0
        %v1782 = vadd.f32 0.0, %v1781
        %v1783 = vpop.f32.mrb[0].mxu0
        %1784 = vmatprep.mubr.bf16.mxu0 0
        %1785 = vmatmul.mubr.bf16.gmra.mrb[0].mxu0 %v692
        %v1786 = vpop.f32.mrb[0].mxu0
        %v1787 = vadd.f32 0.0, %v1786
        %v1788 = vpop.f32.mrb[0].mxu0
        %v1789 = vpop.f32.mrb[0].mxu0
        %v1790 = vadd.f32 0.0, %v1789
        %v1791 = vpop.f32.mrb[0].mxu0
        %1792 = vmatprep.mubr.bf16.mxu0 0
        %1793 = vmatmul.mubr.bf16.gmra.mrb[0].mxu0 %v695
        %v1794 = vpop.f32.mrb[0].mxu0
        %v1795 = vadd.f32 0.0, %v1794
        %v1796 = vpop.f32.mrb[0].mxu0
        %v1797 = vpop.f32.mrb[0].mxu0
        %v1798 = vadd.f32 0.0, %v1797
        %v1799 = vpop.f32.mrb[0].mxu0
        %1800 = vdwg.mxu0
        %v1821 = vcombine.high %v1723, %v1723
        %v1822 = vcombine.high %v1726, %v1726
        %v1823 = vcombine.high %v1734, %v1734
        %v1824 = vcombine.high %v1739, %v1739
        %v1825 = vcombine.high %v1742, %v1742
        %v1826 = vcombine.high %v1747, %v1747
        %v1827 = vcombine.high %v1755, %v1755
        %v1828 = vcombine.high %v1758, %v1758
        %v1829 = vcombine.high %v1763, %v1763
        %v1830 = vcombine.high %v1766, %v1766
        %v1831 = vcombine.high %v1774, %v1774
        %v1832 = vcombine.high %v1779, %v1779
        %v1833 = vcombine.high %v1782, %v1782
        %v1834 = vcombine.high %v1787, %v1787
        %v1835 = vcombine.high %v1795, %v1795
        %v1836 = vcombine.high %v1798, %v1798
        %v1837 = vcombine.low %v1821, %v1726
        %v1838 = vcombine.low %v1822, %v1731
        %v1839 = vcombine.low %v1734, %v1823
        %v1840 = vcombine.low %v1739, %v1824
        %v1841 = vcombine.low %v1825, %v1747
        %v1842 = vcombine.low %v1826, %v1750
        %v1843 = vcombine.low %v1755, %v1827
        %v1844 = vcombine.low %v1758, %v1828
        %v1845 = vcombine.low %v1829, %v1766
        %v1846 = vcombine.low %v1830, %v1771
        %v1847 = vcombine.low %v1774, %v1831
        %v1848 = vcombine.low %v1779, %v1832
        %v1849 = vcombine.low %v1833, %v1787
        %v1850 = vcombine.low %v1834, %v1790
        %v1851 = vcombine.low %v1795, %v1835
        %v1852 = vcombine.low %v1798, %v1836
        %v1869 = vadd.f32 %v1655, %v1837
        %v1870 = vadd.f32 %v1656, %v1838
        %v1871 = vadd.f32 %v1657, %v1839
        %v1872 = vadd.f32 %v1658, %v1840
        %v1873 = vadd.f32 %v1659, %v1841
        %v1874 = vadd.f32 %v1660, %v1842
        %v1875 = vadd.f32 %v1661, %v1843
        %v1876 = vadd.f32 %v1662, %v1844
        %v1877 = vadd.f32 %v1663, %v1845
        %v1878 = vadd.f32 %v1664, %v1846
        %v1879 = vadd.f32 %v1665, %v1847
        %v1880 = vadd.f32 %v1666, %v1848
        %v1881 = vadd.f32 %v1667, %v1849
        %v1882 = vadd.f32 %v1668, %v1850
        %v1883 = vadd.f32 %v1669, %v1851
        %v1884 = vadd.f32 %v1670, %v1852
        %v1885 = vlaneseq
        %v1886 = vshrl.u32 %v1885, 7
        %v1887 = vadd.s32 %v1886, 8
        %v1888 = vld [vmem:[%s3] sm:$0x1]
        %v1889 = vlaneseq
        %v1890 = vshrl.u32 %v1889, 7
        %v1891 = vsub.s32 0, %v1890
        %v1892 = vrot.slane %v1888, %v1891
        %vm1893 = vcmp.lt.s32.totalorder %v1886, %v1892
        %vm1894 = vcmp.lt.s32.totalorder %v1887, %v1892
        %v1895 = vsel %vm1893, %v1869, -inf
        %v1896 = vsel %vm1894, %v1870, -inf
        %v1897 = vsel %vm1893, %v1871, -inf
        %v1898 = vsel %vm1894, %v1872, -inf
        %v1899 = vsel %vm1893, %v1873, -inf
        %v1900 = vsel %vm1894, %v1874, -inf
        %v1901 = vsel %vm1893, %v1875, -inf
        %v1902 = vsel %vm1894, %v1876, -inf
        %v1903 = vsel %vm1893, %v1877, -inf
        %v1904 = vsel %vm1894, %v1878, -inf
        %v1905 = vsel %vm1893, %v1879, -inf
        %v1906 = vsel %vm1894, %v1880, -inf
        %v1907 = vsel %vm1893, %v1881, -inf
        %v1908 = vsel %vm1894, %v1882, -inf
        %v1909 = vsel %vm1893, %v1883, -inf
        %v1910 = vsel %vm1894, %v1884, -inf
        %v1911 = vmax.f32 %v1895, %v1896
        %v1912 = vrot.slane %v1911, 4
        %v1913 = vmax.f32 %v1911, %v1912
        %v1914 = vrot.slane %v1913, 2
        %v1915 = vmax.f32 %v1913, %v1914
        %v1916 = vrot.slane %v1915, 1
        %v1917 = vmax.f32 %v1915, %v1916
        %v1918 = vmax.f32 %v1897, %v1898
        %v1919 = vrot.slane %v1918, 4
        %v1920 = vmax.f32 %v1918, %v1919
        %v1921 = vrot.slane %v1920, 2
        %v1922 = vmax.f32 %v1920, %v1921
        %v1923 = vrot.slane %v1922, 1
        %v1924 = vmax.f32 %v1922, %v1923
        %v1925 = vmax.f32 %v1899, %v1900
        %v1926 = vrot.slane %v1925, 4
        %v1927 = vmax.f32 %v1925, %v1926
        %v1928 = vrot.slane %v1927, 2
        %v1929 = vmax.f32 %v1927, %v1928
        %v1930 = vrot.slane %v1929, 1
        %v1931 = vmax.f32 %v1929, %v1930
        %v1932 = vmax.f32 %v1901, %v1902
        %v1933 = vrot.slane %v1932, 4
        %v1934 = vmax.f32 %v1932, %v1933
        %v1935 = vrot.slane %v1934, 2
        %v1936 = vmax.f32 %v1934, %v1935
        %v1937 = vrot.slane %v1936, 1
        %v1938 = vmax.f32 %v1936, %v1937
        %v1939 = vmax.f32 %v1903, %v1904
        %v1940 = vrot.slane %v1939, 4
        %v1941 = vmax.f32 %v1939, %v1940
        %v1942 = vrot.slane %v1941, 2
        %v1943 = vmax.f32 %v1941, %v1942
        %v1944 = vrot.slane %v1943, 1
        %v1945 = vmax.f32 %v1943, %v1944
        %v1946 = vmax.f32 %v1905, %v1906
        %v1947 = vrot.slane %v1946, 4
        %v1948 = vmax.f32 %v1946, %v1947
        %v1949 = vrot.slane %v1948, 2
        %v1950 = vmax.f32 %v1948, %v1949
        %v1951 = vrot.slane %v1950, 1
        %v1952 = vmax.f32 %v1950, %v1951
        %v1953 = vmax.f32 %v1907, %v1908
        %v1954 = vrot.slane %v1953, 4
        %v1955 = vmax.f32 %v1953, %v1954
        %v1956 = vrot.slane %v1955, 2
        %v1957 = vmax.f32 %v1955, %v1956
        %v1958 = vrot.slane %v1957, 1
        %v1959 = vmax.f32 %v1957, %v1958
        %v1960 = vmax.f32 %v1909, %v1910
        %v1961 = vrot.slane %v1960, 4
        %v1962 = vmax.f32 %v1960, %v1961
        %v1963 = vrot.slane %v1962, 2
        %v1964 = vmax.f32 %v1962, %v1963
        %v1965 = vrot.slane %v1964, 1
        %v1966 = vmax.f32 %v1964, %v1965
        %vm1967 = vcmp.eq.f32.partialorder %v1895, %v1917
        %vm1968 = vcmp.eq.f32.partialorder %v1896, %v1917
        %vm1969 = vcmp.eq.f32.partialorder %v1897, %v1924
        %vm1970 = vcmp.eq.f32.partialorder %v1898, %v1924
        %vm1971 = vcmp.eq.f32.partialorder %v1899, %v1931
        %vm1972 = vcmp.eq.f32.partialorder %v1900, %v1931
        %vm1973 = vcmp.eq.f32.partialorder %v1901, %v1938
        %vm1974 = vcmp.eq.f32.partialorder %v1902, %v1938
        %vm1975 = vcmp.eq.f32.partialorder %v1903, %v1945
        %vm1976 = vcmp.eq.f32.partialorder %v1904, %v1945
        %vm1977 = vcmp.eq.f32.partialorder %v1905, %v1952
        %vm1978 = vcmp.eq.f32.partialorder %v1906, %v1952
        %vm1979 = vcmp.eq.f32.partialorder %v1907, %v1959
        %vm1980 = vcmp.eq.f32.partialorder %v1908, %v1959
        %vm1981 = vcmp.eq.f32.partialorder %v1909, %v1966
        %vm1982 = vcmp.eq.f32.partialorder %v1910, %v1966
        %v1983 = vsel %vm1967, %v1886, 16
        %v1984 = vsel %vm1968, %v1887, 16
        %v1985 = vsel %vm1969, %v1886, 16
        %v1986 = vsel %vm1970, %v1887, 16
        %v1987 = vsel %vm1971, %v1886, 16
        %v1988 = vsel %vm1972, %v1887, 16
        %v1989 = vsel %vm1973, %v1886, 16
        %v1990 = vsel %vm1974, %v1887, 16
        %v1991 = vsel %vm1975, %v1886, 16
        %v1992 = vsel %vm1976, %v1887, 16
        %v1993 = vsel %vm1977, %v1886, 16
        %v1994 = vsel %vm1978, %v1887, 16
        %v1995 = vsel %vm1979, %v1886, 16
        %v1996 = vsel %vm1980, %v1887, 16
        %v1997 = vsel %vm1981, %v1886, 16
        %v1998 = vsel %vm1982, %v1887, 16
        %vm1999 = vcmp.lt.s32.totalorder %v1983, %v1984
        %v2000 = vsel %vm1999, %v1983, %v1984
        %v2001 = vrot.slane %v2000, 4
        %vm2002 = vcmp.lt.s32.totalorder %v2000, %v2001
        %v2003 = vsel %vm2002, %v2000, %v2001
        %v2004 = vrot.slane %v2003, 2
        %vm2005 = vcmp.lt.s32.totalorder %v2003, %v2004
        %v2006 = vsel %vm2005, %v2003, %v2004
        %v2007 = vrot.slane %v2006, 1
        %vm2008 = vcmp.lt.s32.totalorder %v2006, %v2007
        %v2009 = vsel %vm2008, %v2006, %v2007
        %vm2010 = vcmp.lt.s32.totalorder %v1985, %v1986
        %v2011 = vsel %vm2010, %v1985, %v1986
        %v2012 = vrot.slane %v2011, 4
        %vm2013 = vcmp.lt.s32.totalorder %v2011, %v2012
        %v2014 = vsel %vm2013, %v2011, %v2012
        %v2015 = vrot.slane %v2014, 2
        %vm2016 = vcmp.lt.s32.totalorder %v2014, %v2015
        %v2017 = vsel %vm2016, %v2014, %v2015
        %v2018 = vrot.slane %v2017, 1
        %vm2019 = vcmp.lt.s32.totalorder %v2017, %v2018
        %v2020 = vsel %vm2019, %v2017, %v2018
        %vm2021 = vcmp.lt.s32.totalorder %v1987, %v1988
        %v2022 = vsel %vm2021, %v1987, %v1988
        %v2023 = vrot.slane %v2022, 4
        %vm2024 = vcmp.lt.s32.totalorder %v2022, %v2023
        %v2025 = vsel %vm2024, %v2022, %v2023
        %v2026 = vrot.slane %v2025, 2
        %vm2027 = vcmp.lt.s32.totalorder %v2025, %v2026
        %v2028 = vsel %vm2027, %v2025, %v2026
        %v2029 = vrot.slane %v2028, 1
        %vm2030 = vcmp.lt.s32.totalorder %v2028, %v2029
        %v2031 = vsel %vm2030, %v2028, %v2029
        %vm2032 = vcmp.lt.s32.totalorder %v1989, %v1990
        %v2033 = vsel %vm2032, %v1989, %v1990
        %v2034 = vrot.slane %v2033, 4
        %vm2035 = vcmp.lt.s32.totalorder %v2033, %v2034
        %v2036 = vsel %vm2035, %v2033, %v2034
        %v2037 = vrot.slane %v2036, 2
        %vm2038 = vcmp.lt.s32.totalorder %v2036, %v2037
        %v2039 = vsel %vm2038, %v2036, %v2037
        %v2040 = vrot.slane %v2039, 1
        %vm2041 = vcmp.lt.s32.totalorder %v2039, %v2040
        %v2042 = vsel %vm2041, %v2039, %v2040
        %vm2043 = vcmp.lt.s32.totalorder %v1991, %v1992
        %v2044 = vsel %vm2043, %v1991, %v1992
        %v2045 = vrot.slane %v2044, 4
        %vm2046 = vcmp.lt.s32.totalorder %v2044, %v2045
        %v2047 = vsel %vm2046, %v2044, %v2045
        %v2048 = vrot.slane %v2047, 2
        %vm2049 = vcmp.lt.s32.totalorder %v2047, %v2048
        %v2050 = vsel %vm2049, %v2047, %v2048
        %v2051 = vrot.slane %v2050, 1
        %vm2052 = vcmp.lt.s32.totalorder %v2050, %v2051
        %v2053 = vsel %vm2052, %v2050, %v2051
        %vm2054 = vcmp.lt.s32.totalorder %v1993, %v1994
        %v2055 = vsel %vm2054, %v1993, %v1994
        %v2056 = vrot.slane %v2055, 4
        %vm2057 = vcmp.lt.s32.totalorder %v2055, %v2056
        %v2058 = vsel %vm2057, %v2055, %v2056
        %v2059 = vrot.slane %v2058, 2
        %vm2060 = vcmp.lt.s32.totalorder %v2058, %v2059
        %v2061 = vsel %vm2060, %v2058, %v2059
        %v2062 = vrot.slane %v2061, 1
        %vm2063 = vcmp.lt.s32.totalorder %v2061, %v2062
        %v2064 = vsel %vm2063, %v2061, %v2062
        %vm2065 = vcmp.lt.s32.totalorder %v1995, %v1996
        %v2066 = vsel %vm2065, %v1995, %v1996
        %v2067 = vrot.slane %v2066, 4
        %vm2068 = vcmp.lt.s32.totalorder %v2066, %v2067
        %v2069 = vsel %vm2068, %v2066, %v2067
        %v2070 = vrot.slane %v2069, 2
        %vm2071 = vcmp.lt.s32.totalorder %v2069, %v2070
        %v2072 = vsel %vm2071, %v2069, %v2070
        %v2073 = vrot.slane %v2072, 1
        %vm2074 = vcmp.lt.s32.totalorder %v2072, %v2073
        %v2075 = vsel %vm2074, %v2072, %v2073
        %vm2076 = vcmp.lt.s32.totalorder %v1997, %v1998
        %v2077 = vsel %vm2076, %v1997, %v1998
        %v2078 = vrot.slane %v2077, 4
        %vm2079 = vcmp.lt.s32.totalorder %v2077, %v2078
        %v2080 = vsel %vm2079, %v2077, %v2078
        %v2081 = vrot.slane %v2080, 2
        %vm2082 = vcmp.lt.s32.totalorder %v2080, %v2081
        %v2083 = vsel %vm2082, %v2080, %v2081
        %v2084 = vrot.slane %v2083, 1
        %vm2085 = vcmp.lt.s32.totalorder %v2083, %v2084
        %v2086 = vsel %vm2085, %v2083, %v2084
        %vm2095 = vcmask 1041409
        %v2096 = vsel %vm2095, %v1924, %v1917
        %vm2097 = vcmask 1042434
        %v2098 = vsel %vm2097, %v1931, %v2096
        %vm2099 = vcmask 1043459
        %v2100 = vsel %vm2099, %v1938, %v2098
        %vm2101 = vcmask 1044484
        %v2102 = vsel %vm2101, %v1945, %v2100
        %vm2103 = vcmask 1045509
        %v2104 = vsel %vm2103, %v1952, %v2102
        %vm2105 = vcmask 1046534
        %v2106 = vsel %vm2105, %v1959, %v2104
        %vm2107 = vcmask 1047559
        %v2108 = vsel %vm2107, %v1966, %v2106
        %2110 = vst [vmem:[%s224] sm:$0xff] %v2108
        %v2111 = vsel %vm2095, %v2020, %v2009
        %v2112 = vsel %vm2097, %v2031, %v2111
        %v2113 = vsel %vm2099, %v2042, %v2112
        %v2114 = vsel %vm2101, %v2053, %v2113
        %v2115 = vsel %vm2103, %v2064, %v2114
        %v2116 = vsel %vm2105, %v2075, %v2115
        %v2117 = vsel %vm2107, %v2086, %v2116
        %2118 = vst [vmem:[%s231] sm:$0xff] %v2117
        %s2119 = sand.u32 %s120, 1
        %s2120 = scalar_lea.sflag [#allocation3], %s2119
        %s2121 = sand.u32 %s120, 1
        %s2122 = smul.addr %s2121, 8
        %s2123 = scalar_lea.vmem [#allocation2], %s2122
        %s2124 = sand.u32 %s146, 1
        %s2125 = scalar_lea.sflag [#allocation5], %s2124
        %s2126 = sand.u32 %s146, 1
        %s2127 = smul.addr %s2126, 8
        %s2128 = scalar_lea.vmem [#allocation4], %s2127
        // Predicated region
        $region37: #{tpu_custom_call.1} parent=35 // pred_check
          %p2129 = pneg %p130
        $region38: #{tpu_custom_call.1} parent=35 // pred_check_branch
          %2131 = sbr.rel (%p2129) target = $region40
        $region39: #{tpu_custom_call.1} parent=35 // pred_region
          %s2133 = ssub.s32 128, 128
          %2134 = vsyncadd %s2120, %s2133
          %s2135 = smul.addr %s23, 128
          %s2136 = scalar_lea.hbm %s4, %s2135
          %s2138 = sshll.u32 %s2123, 4
          %s2139 = int_to_ptr.vmem [resolvable:$true] %s2138
          %2141 = dma.vmem_to_hbm [thread:$0]  %s2139, 128, %s2136, %s2120
        $region40: #{tpu_custom_call.1} parent=35 // pred_fallthru
          _
        // Predicated region
        $region41: #{tpu_custom_call.1} parent=35 // pred_check
          %p2142 = pneg %p156
        $region42: #{tpu_custom_call.1} parent=35 // pred_check_branch
          %2144 = sbr.rel (%p2142) target = $region44
        $region43: #{tpu_custom_call.1} parent=35 // pred_region
          %s2146 = ssub.s32 128, 128
          %2147 = vsyncadd %s2125, %s2146
          %s2148 = smul.addr %s23, 128
          %s2149 = scalar_lea.hbm %s5, %s2148
          %s2151 = sshll.u32 %s2128, 4
          %s2152 = int_to_ptr.vmem [resolvable:$true] %s2151
          %2154 = dma.vmem_to_hbm [thread:$0]  %s2152, 128, %s2149, %s2125
        $region44: #{tpu_custom_call.1} parent=35 // pred_fallthru
          _
      $region36: #{tpu_custom_call.1} parent=5 // pred_fallthru
        _
      %p2155 = scmp.le.s32.totalorder 2, %s18
      // Predicated region
      $region45: #{tpu_custom_call.1} parent=5 // pred_check
        %p2156 = pneg %p2155
      $region46: #{tpu_custom_call.1} parent=5 // pred_check_branch
        %2158 = sbr.rel (%p2156) target = $region48
      $region47: #{tpu_custom_call.1} parent=5 // pred_region
        %s2159 = ssub.s32 %s18, 2
        // Predicated region
        $region49: #{tpu_custom_call.1} parent=47 // pred_check
          %p2160 = pneg %p136
        $region50: #{tpu_custom_call.1} parent=47 // pred_check_branch
          %2162 = sbr.rel (%p2160) target = $region52
        $region51: #{tpu_custom_call.1} parent=47 // pred_region
          %s2163 = sand.u32 %s121, 1
          %s2164 = scalar_lea.sflag [#allocation3], %s2163
          %s2165 = sand.u32 %s121, 1
          %s2166 = smul.addr %s2165, 8
          %s2167 = scalar_lea.vmem [#allocation2], %s2166
          %2168 = dma.done %s2164, 128
        $region52: #{tpu_custom_call.1} parent=47 // pred_fallthru
          _
        // Predicated region
        $region53: #{tpu_custom_call.1} parent=47 // pred_check
          %p2169 = pneg %p162
        $region54: #{tpu_custom_call.1} parent=47 // pred_check_branch
          %2171 = sbr.rel (%p2169) target = $region56
        $region55: #{tpu_custom_call.1} parent=47 // pred_region
          %s2172 = sand.u32 %s147, 1
          %s2173 = scalar_lea.sflag [#allocation5], %s2172
          %s2174 = sand.u32 %s147, 1
          %s2175 = smul.addr %s2174, 8
          %s2176 = scalar_lea.vmem [#allocation4], %s2175
          %2177 = dma.done %s2173, 128
        $region56: #{tpu_custom_call.1} parent=47 // pred_fallthru
          _
      $region48: #{tpu_custom_call.1} parent=5 // pred_fallthru
        _
    $region6: #{tpu_custom_call.1} parent=1 // loop_footer
      %s22 = sadd.s32 1, %s18
    $region7: #{tpu_custom_call.1} parent=1 // loop_footer_branch
      %17 = sbr.rel target = $region3
    $region8: #{tpu_custom_call.1} parent=1 // loop_exit
      _
    %2178 = vsyncpa [#allocation3], 1
    %s2179 = scalar_lea.sflag [#allocation3], 1
    %2180 = vsyncpa %s2179, 1
    %2181 = vsyncpa [#allocation5], 1
    %s2182 = scalar_lea.sflag [#allocation5], 1
    %2183 = vsyncpa %s2182, 1

</llo_original>
